<compile_context>
chip_gen: v7x
topology: tpu7x:2x2x1
jax: 0.10.0
libtpu: 0.0.40
codegen_flags: <defaults>
</compile_context>

<pallas_src>
import functools

import jax
import jax.numpy as jnp
from jax.experimental import pallas as pl
from jax.experimental.pallas import tpu as pltpu

EPS = 1e-5


def _round_up(x, m):
    return (x + m - 1) // m * m


# ---------------------------------------------------------------------------
# Pass 1: conv (in-kernel im2col via shifted dots) + InstanceNorm half + ReLU,
#         raw BatchNorm half + accumulated BN sum / sumsq over the batch.
# ---------------------------------------------------------------------------
def _conv_in_stats_kernel(x_ref, w_ref, b_ref, mask_ref,
                          y_ref, bsum_ref, bsq_ref, *,
                          ksize, wp, l_pad, c_bn, inv_hw, mxu_dtype):
    n = pl.program_id(0)
    c_out = w_ref.shape[1]

    # ---- conv: K*K shifted [Cout,Cin] @ [Cin,L_pad] dots, f32 accumulation ----
    xv = x_ref[0]                                        # [Cin, Lin_pad] f32
    acc = jnp.zeros((c_out, l_pad), jnp.float32)
    for idx in range(ksize * ksize):
        kh, kw = divmod(idx, ksize)
        shift = kh * wp + kw
        xs = xv[:, shift:shift + l_pad].astype(mxu_dtype)    # [Cin, L_pad]
        acc = acc + jnp.dot(w_ref[idx], xs,
                            preferred_element_type=jnp.float32)
    acc = acc + b_ref[...]                               # bias [Cout,1] bcast

    mask = mask_ref[...]                                 # [1, L_pad] valid-lane mask

    # ---- InstanceNorm half: per-sample masked lane-axis stats + ReLU --------
    y_in = acc[c_bn:, :]                                 # [c_in, L_pad]
    mu_i = jnp.sum(y_in * mask, axis=1, keepdims=True) * inv_hw
    d_i = (y_in - mu_i) * mask
    var_i = jnp.sum(d_i * d_i, axis=1, keepdims=True) * inv_hw
    y_ref[0, c_bn:, :] = jnp.maximum(
        (y_in - mu_i) * jax.lax.rsqrt(var_i + EPS), 0.0)

    # ---- BatchNorm half: store raw conv output, accumulate batch stats ------
    y_bn = acc[:c_bn, :]                                 # [c_bn, L_pad]
    y_ref[0, :c_bn, :] = y_bn

    @pl.when(n == 0)
    def _():
        bsum_ref[...] = jnp.zeros_like(bsum_ref)
        bsq_ref[...] = jnp.zeros_like(bsq_ref)

    ym = y_bn * mask
    bsum_ref[...] += jnp.sum(ym, axis=1, keepdims=True)
    bsq_ref[...] += jnp.sum(ym * y_bn, axis=1, keepdims=True)


# ---------------------------------------------------------------------------
# Pass 2: apply BatchNorm (batch stats + affine) + ReLU to the BN half,
#         pass the already-finished InstanceNorm half through.
# ---------------------------------------------------------------------------
def _bn_finalize_kernel(y_ref, bsum_ref, bsq_ref, g_ref, beta_ref, o_ref, *,
                        c_bn, inv_count):
    y = y_ref[0]                                         # [Cout, L_pad]
    mean = bsum_ref[...] * inv_count                     # [c_bn, 1]
    var = bsq_ref[...] * inv_count - mean * mean
    scale = g_ref[...] * jax.lax.rsqrt(var + EPS)
    shift = beta_ref[...] - mean * scale
    o_ref[0, :c_bn, :] = jnp.maximum(y[:c_bn, :] * scale + shift, 0.0)
    o_ref[0, c_bn:, :] = y[c_bn:, :]


def _vmem_limit(block_bytes):
    need = 4 * block_bytes + (1 << 20)      # double-buffering + headroom
    return int(min(max(need, 4 << 20), 100 << 20))


def conv2d_ibnorm_relu(x, weight, bias, gamma, beta, *, stride=1, padding=1,
                       mxu_dtype=jnp.float32):
    """x: [N, Cin, H, W] f32, weight: [Cout, Cin, K, K], bias: [Cout],
    gamma/beta: [Cout//2] (BatchNorm affine). Returns NCHW output."""
    assert stride == 1  # TODO(synk): strided conv not implemented in-kernel.
    N, Cin, H, W = x.shape
    Cout, _, K, _ = weight.shape
    Hp, Wp = H + 2 * padding, W + 2 * padding
    Ho, Wo = Hp - K + 1, Wp - K + 1
    c_bn = Cout // 2

    # Lane-axis slab: all flat positions q = ho*Wp + wo (row tails wo >= Wo are
    # garbage, masked out of the stats and sliced away at the end).
    l_pad = _round_up(Ho * Wp, 128)
    s_max = (K - 1) * Wp + (K - 1)
    lin_pad = _round_up(l_pad + s_max, 128)

    f32 = jnp.float32
    x = x.astype(f32)
    xp = jnp.pad(x, ((0, 0), (0, 0), (padding, padding), (padding, padding)))
    xflat = xp.reshape(N, Cin, Hp * Wp)
    xflat = jnp.pad(xflat, ((0, 0), (0, 0), (0, lin_pad - Hp * Wp)))

    # weights as [K*K, Cout, Cin] so each tap is a ready-to-use [Cout, Cin] tile
    w_t = weight.astype(f32).transpose(2, 3, 0, 1).reshape(K * K, Cout, Cin)
    w_t = w_t.astype(mxu_dtype)
    b2 = bias.reshape(Cout, 1).astype(f32)
    g2 = gamma.reshape(c_bn, 1).astype(f32)
    be2 = beta.reshape(c_bn, 1).astype(f32)

    q = jnp.arange(l_pad)
    mask = ((q < Ho * Wp) & (q % Wp < Wo)).astype(f32).reshape(1, l_pad)

    itemsize = jnp.dtype(mxu_dtype).itemsize
    blk1 = (Cin * lin_pad * 4 + K * K * Cout * Cin * itemsize + Cout * 4
            + l_pad * 4 + Cout * l_pad * 4 + 2 * c_bn * 4)
    cost1 = pl.CostEstimate(
        flops=2 * N * Ho * Wo * Cin * K * K * Cout,
        transcendentals=N * (Cout - c_bn),
        bytes_accessed=int(xflat.size * 4 + w_t.size * itemsize
                           + N * Cout * l_pad * 4))

    kernel1 = functools.partial(
        _conv_in_stats_kernel, ksize=K, wp=Wp, l_pad=l_pad, c_bn=c_bn,
        inv_hw=1.0 / (Ho * Wo), mxu_dtype=mxu_dtype)

    y_mid, bsum, bsq = pl.pallas_call(
        kernel1,
        out_shape=(
            jax.ShapeDtypeStruct((N, Cout, l_pad), f32),
            jax.ShapeDtypeStruct((c_bn, 1), f32),
            jax.ShapeDtypeStruct((c_bn, 1), f32),
        ),
        grid_spec=pltpu.PrefetchScalarGridSpec(
            num_scalar_prefetch=0,
            grid=(N,),
            in_specs=[
                pl.BlockSpec((1, Cin, lin_pad), lambda n: (n, 0, 0)),
                pl.BlockSpec((K * K, Cout, Cin), lambda n: (0, 0, 0)),
                pl.BlockSpec((Cout, 1), lambda n: (0, 0)),
                pl.BlockSpec((1, l_pad), lambda n: (0, 0)),
            ],
            out_specs=[
                pl.BlockSpec((1, Cout, l_pad), lambda n: (n, 0, 0)),
                pl.BlockSpec((c_bn, 1), lambda n: (0, 0)),
                pl.BlockSpec((c_bn, 1), lambda n: (0, 0)),
            ],
        ),
        compiler_params=pltpu.CompilerParams(
            # accumulator outputs are resident across N -> must be "arbitrary"
            dimension_semantics=("arbitrary",),
            vmem_limit_bytes=_vmem_limit(blk1)),
        cost_estimate=cost1,
    )(xflat, w_t, b2, mask)

    kernel2 = functools.partial(_bn_finalize_kernel, c_bn=c_bn,
                                inv_count=1.0 / (N * Ho * Wo))
    blk2 = 2 * Cout * l_pad * 4 + 4 * c_bn * 4
    out = pl.pallas_call(
        kernel2,
        out_shape=jax.ShapeDtypeStruct((N, Cout, l_pad), f32),
        grid_spec=pltpu.PrefetchScalarGridSpec(
            num_scalar_prefetch=0,
            grid=(N,),
            in_specs=[
                pl.BlockSpec((1, Cout, l_pad), lambda n: (n, 0, 0)),
                pl.BlockSpec((c_bn, 1), lambda n: (0, 0)),
                pl.BlockSpec((c_bn, 1), lambda n: (0, 0)),
                pl.BlockSpec((c_bn, 1), lambda n: (0, 0)),
                pl.BlockSpec((c_bn, 1), lambda n: (0, 0)),
            ],
            out_specs=pl.BlockSpec((1, Cout, l_pad), lambda n: (n, 0, 0)),
        ),
        compiler_params=pltpu.CompilerParams(
            dimension_semantics=("parallel",),   # megacore-shardable (v7x)
            vmem_limit_bytes=_vmem_limit(blk2)),
    )(y_mid, bsum, bsq, g2, be2)

    # extract valid flat positions q = ho*Wp + wo (wo < Wo): pure slice/reshape,
    # no NCHW transpose needed.
    # TODO(synk): for very large spatial extents, also tile the lane (spatial)
    # axis and the InstanceNorm stats across lane tiles.
    return out[:, :, :Ho * Wp].reshape(N, Cout, Ho, Wp)[:, :, :, :Wo]


def _reference(x, weight, bias, gamma, beta, stride, padding):
    """Pure-JAX reference reproducing the PyTorch module semantics."""
    y = jax.lax.conv_general_dilated(
        x, weight, (stride, stride),
        [(padding, padding), (padding, padding)],
        dimension_numbers=("NCHW", "OIHW", "NCHW"))
    y = y + bias.reshape(1, -1, 1, 1)
    Cout = y.shape[1]
    cb = Cout // 2
    bn = y[:, :cb]
    mu = bn.mean(axis=(0, 2, 3), keepdims=True)
    var = jnp.square(bn - mu).mean(axis=(0, 2, 3), keepdims=True)
    bn = (bn - mu) / jnp.sqrt(var + EPS) * gamma.reshape(1, -1, 1, 1) \
        + beta.reshape(1, -1, 1, 1)
    inx = y[:, cb:]
    mu_i = inx.mean(axis=(2, 3), keepdims=True)
    var_i = jnp.square(inx - mu_i).mean(axis=(2, 3), keepdims=True)
    inx = (inx - mu_i) / jnp.sqrt(var_i + EPS)
    return jnp.maximum(jnp.concatenate([bn, inx], axis=1), 0.0)


if __name__ == "__main__":
    # Conv2dIBNormRelu(in_channels=4, out_channels=8, kernel_size=3,
    #                  stride=1, padding=1, bias=True, with_ibn=True, with_relu=True)
    N, Cin, H, W = 2, 4, 16, 16
    Cout, K, stride, padding = 8, 3, 1, 1

    key = jax.random.PRNGKey(0)
    kx, kw, kb, kg, kbe = jax.random.split(key, 5)

    x = jax.random.normal(kx, (N, Cin, H, W), dtype=jnp.float32)
    weight = jax.random.normal(kw, (Cout, Cin, K, K), dtype=jnp.float32) * 0.1
    bias = jax.random.normal(kb, (Cout,), dtype=jnp.float32) * 0.1
    gamma = 1.0 + 0.1 * jax.random.normal(kg, (Cout // 2,), dtype=jnp.float32)
    beta = 0.1 * jax.random.normal(kbe, (Cout // 2,), dtype=jnp.float32)

    fn = jax.jit(conv2d_ibnorm_relu,
                 static_argnames=("stride", "padding", "mxu_dtype"))

    ref = _reference(x, weight, bias, gamma, beta, stride, padding)

    # f32 MXU path (exact parity with reference).
    out = jax.block_until_ready(
        fn(x, weight, bias, gamma, beta, stride=stride, padding=padding,
           mxu_dtype=jnp.float32))
    assert out.shape == (N, Cout, H, W)
    assert jnp.allclose(out, ref, atol=1e-4, rtol=1e-4), \
        f"f32 max abs err {jnp.max(jnp.abs(out - ref))}"

    # bf16 MXU operands (v6e/v7x fast path), f32 accumulate + f32 norm math.
    out_bf16 = jax.block_until_ready(
        fn(x, weight, bias, gamma, beta, stride=stride, padding=padding,
           mxu_dtype=jnp.bfloat16))
    assert jnp.allclose(out_bf16, ref, atol=1e-1, rtol=1e-1), \
        f"bf16 max abs err {jnp.max(jnp.abs(out_bf16 - ref))}"

    print("KERNEL_OK")
</pallas_src>

<mosaic_0001>
module attributes {stable_mosaic.version = 11 : i64} {
  func.func @_conv_in_stats_kernel(%arg0: i32, %arg1: memref<1x4x512xf32, #tpu.memory_space<vmem>>, %arg2: memref<9x8x4xf32, #tpu.memory_space<vmem>>, %arg3: memref<8x1xf32, #tpu.memory_space<vmem>>, %arg4: memref<1x384xf32, #tpu.memory_space<vmem>>, %arg5: memref<1x8x384xf32, #tpu.memory_space<vmem>>, %arg6: memref<4x1xf32, #tpu.memory_space<vmem>>, %arg7: memref<4x1xf32, #tpu.memory_space<vmem>>) attributes {dimension_semantics = [#tpu.dimension_semantics<arbitrary>], iteration_bounds = array<i64: 2>, scalar_prefetch = 0 : i64, scratch_operands = 0 : i64, tpu.core_type = #tpu.core_type<tc>, window_params = [{transform_indices = @transform_0, window_bounds = array<i64: 1, 4, 512>}, {pipeline_mode = #tpu.pipeline_mode<synchronous>, transform_indices = @transform_1, window_bounds = array<i64: 9, 8, 4>}, {pipeline_mode = #tpu.pipeline_mode<synchronous>, transform_indices = @transform_2, window_bounds = array<i64: 8, 1>}, {pipeline_mode = #tpu.pipeline_mode<synchronous>, transform_indices = @transform_3, window_bounds = array<i64: 1, 384>}, {transform_indices = @transform_4, window_bounds = array<i64: 1, 8, 384>}, {pipeline_mode = #tpu.pipeline_mode<synchronous>, transform_indices = @transform_5, window_bounds = array<i64: 4, 1>}, {pipeline_mode = #tpu.pipeline_mode<synchronous>, transform_indices = @transform_6, window_bounds = array<i64: 4, 1>}]} {
    %c0 = arith.constant 0 : index
    %c0_0 = arith.constant 0 : index
    %c0_1 = arith.constant 0 : index
    %0 = vector.load %arg1[%c0, %c0_0, %c0_1] : memref<1x4x512xf32, #tpu.memory_space<vmem>>, vector<1x4x512xf32>
    %1 = vector.shape_cast %0 : vector<1x4x512xf32> to vector<4x512xf32>
    %cst = arith.constant 0.000000e+00 : f32
    %2 = vector.broadcast %cst : f32 to vector<8x384xf32>
    %3 = vector.extract_strided_slice %1 {offsets = [0, 0], sizes = [4, 384], strides = [1, 1]} : vector<4x512xf32> to vector<4x384xf32>
    %c0_2 = arith.constant 0 : index
    %c0_3 = arith.constant 0 : index
    %c0_4 = arith.constant 0 : index
    %4 = vector.load %arg2[%c0_2, %c0_3, %c0_4] : memref<9x8x4xf32, #tpu.memory_space<vmem>>, vector<1x8x4xf32>
    %5 = vector.shape_cast %4 : vector<1x8x4xf32> to vector<8x4xf32>
    %cst_5 = arith.constant dense<0.000000e+00> : vector<8x384xf32>
    %6 = tpu.matmul %5, %3, %cst_5 {dimension_numbers = #tpu.dot_dimension_numbers<[1], [0], [0], [1], [0, 0, 1, 1], [], []>} : vector<8x4xf32>, vector<4x384xf32>, vector<8x384xf32> -> vector<8x384xf32>
    %7 = arith.addf %2, %6 : vector<8x384xf32>
    %8 = vector.extract_strided_slice %1 {offsets = [0, 1], sizes = [4, 384], strides = [1, 1]} : vector<4x512xf32> to vector<4x384xf32>
    %c1 = arith.constant 1 : index
    %c0_6 = arith.constant 0 : index
    %c0_7 = arith.constant 0 : index
    %9 = vector.load %arg2[%c1, %c0_6, %c0_7] : memref<9x8x4xf32, #tpu.memory_space<vmem>>, vector<1x8x4xf32>
    %10 = vector.shape_cast %9 : vector<1x8x4xf32> to vector<8x4xf32>
    %cst_8 = arith.constant dense<0.000000e+00> : vector<8x384xf32>
    %11 = tpu.matmul %10, %8, %cst_8 {dimension_numbers = #tpu.dot_dimension_numbers<[1], [0], [0], [1], [0, 0, 1, 1], [], []>} : vector<8x4xf32>, vector<4x384xf32>, vector<8x384xf32> -> vector<8x384xf32>
    %12 = arith.addf %7, %11 : vector<8x384xf32>
    %13 = vector.extract_strided_slice %1 {offsets = [0, 2], sizes = [4, 384], strides = [1, 1]} : vector<4x512xf32> to vector<4x384xf32>
    %c2 = arith.constant 2 : index
    %c0_9 = arith.constant 0 : index
    %c0_10 = arith.constant 0 : index
    %14 = vector.load %arg2[%c2, %c0_9, %c0_10] : memref<9x8x4xf32, #tpu.memory_space<vmem>>, vector<1x8x4xf32>
    %15 = vector.shape_cast %14 : vector<1x8x4xf32> to vector<8x4xf32>
    %cst_11 = arith.constant dense<0.000000e+00> : vector<8x384xf32>
    %16 = tpu.matmul %15, %13, %cst_11 {dimension_numbers = #tpu.dot_dimension_numbers<[1], [0], [0], [1], [0, 0, 1, 1], [], []>} : vector<8x4xf32>, vector<4x384xf32>, vector<8x384xf32> -> vector<8x384xf32>
    %17 = arith.addf %12, %16 : vector<8x384xf32>
    %18 = vector.extract_strided_slice %1 {offsets = [0, 18], sizes = [4, 384], strides = [1, 1]} : vector<4x512xf32> to vector<4x384xf32>
    %c3 = arith.constant 3 : index
    %c0_12 = arith.constant 0 : index
    %c0_13 = arith.constant 0 : index
    %19 = vector.load %arg2[%c3, %c0_12, %c0_13] : memref<9x8x4xf32, #tpu.memory_space<vmem>>, vector<1x8x4xf32>
    %20 = vector.shape_cast %19 : vector<1x8x4xf32> to vector<8x4xf32>
    %cst_14 = arith.constant dense<0.000000e+00> : vector<8x384xf32>
    %21 = tpu.matmul %20, %18, %cst_14 {dimension_numbers = #tpu.dot_dimension_numbers<[1], [0], [0], [1], [0, 0, 1, 1], [], []>} : vector<8x4xf32>, vector<4x384xf32>, vector<8x384xf32> -> vector<8x384xf32>
    %22 = arith.addf %17, %21 : vector<8x384xf32>
    %23 = vector.extract_strided_slice %1 {offsets = [0, 19], sizes = [4, 384], strides = [1, 1]} : vector<4x512xf32> to vector<4x384xf32>
    %c4 = arith.constant 4 : index
    %c0_15 = arith.constant 0 : index
    %c0_16 = arith.constant 0 : index
    %24 = vector.load %arg2[%c4, %c0_15, %c0_16] : memref<9x8x4xf32, #tpu.memory_space<vmem>>, vector<1x8x4xf32>
    %25 = vector.shape_cast %24 : vector<1x8x4xf32> to vector<8x4xf32>
    %cst_17 = arith.constant dense<0.000000e+00> : vector<8x384xf32>
    %26 = tpu.matmul %25, %23, %cst_17 {dimension_numbers = #tpu.dot_dimension_numbers<[1], [0], [0], [1], [0, 0, 1, 1], [], []>} : vector<8x4xf32>, vector<4x384xf32>, vector<8x384xf32> -> vector<8x384xf32>
    %27 = arith.addf %22, %26 : vector<8x384xf32>
    %28 = vector.extract_strided_slice %1 {offsets = [0, 20], sizes = [4, 384], strides = [1, 1]} : vector<4x512xf32> to vector<4x384xf32>
    %c5 = arith.constant 5 : index
    %c0_18 = arith.constant 0 : index
    %c0_19 = arith.constant 0 : index
    %29 = vector.load %arg2[%c5, %c0_18, %c0_19] : memref<9x8x4xf32, #tpu.memory_space<vmem>>, vector<1x8x4xf32>
    %30 = vector.shape_cast %29 : vector<1x8x4xf32> to vector<8x4xf32>
    %cst_20 = arith.constant dense<0.000000e+00> : vector<8x384xf32>
    %31 = tpu.matmul %30, %28, %cst_20 {dimension_numbers = #tpu.dot_dimension_numbers<[1], [0], [0], [1], [0, 0, 1, 1], [], []>} : vector<8x4xf32>, vector<4x384xf32>, vector<8x384xf32> -> vector<8x384xf32>
    %32 = arith.addf %27, %31 : vector<8x384xf32>
    %33 = vector.extract_strided_slice %1 {offsets = [0, 36], sizes = [4, 384], strides = [1, 1]} : vector<4x512xf32> to vector<4x384xf32>
    %c6 = arith.constant 6 : index
    %c0_21 = arith.constant 0 : index
    %c0_22 = arith.constant 0 : index
    %34 = vector.load %arg2[%c6, %c0_21, %c0_22] : memref<9x8x4xf32, #tpu.memory_space<vmem>>, vector<1x8x4xf32>
    %35 = vector.shape_cast %34 : vector<1x8x4xf32> to vector<8x4xf32>
    %cst_23 = arith.constant dense<0.000000e+00> : vector<8x384xf32>
    %36 = tpu.matmul %35, %33, %cst_23 {dimension_numbers = #tpu.dot_dimension_numbers<[1], [0], [0], [1], [0, 0, 1, 1], [], []>} : vector<8x4xf32>, vector<4x384xf32>, vector<8x384xf32> -> vector<8x384xf32>
    %37 = arith.addf %32, %36 : vector<8x384xf32>
    %38 = vector.extract_strided_slice %1 {offsets = [0, 37], sizes = [4, 384], strides = [1, 1]} : vector<4x512xf32> to vector<4x384xf32>
    %c7 = arith.constant 7 : index
    %c0_24 = arith.constant 0 : index
    %c0_25 = arith.constant 0 : index
    %39 = vector.load %arg2[%c7, %c0_24, %c0_25] : memref<9x8x4xf32, #tpu.memory_space<vmem>>, vector<1x8x4xf32>
    %40 = vector.shape_cast %39 : vector<1x8x4xf32> to vector<8x4xf32>
    %cst_26 = arith.constant dense<0.000000e+00> : vector<8x384xf32>
    %41 = tpu.matmul %40, %38, %cst_26 {dimension_numbers = #tpu.dot_dimension_numbers<[1], [0], [0], [1], [0, 0, 1, 1], [], []>} : vector<8x4xf32>, vector<4x384xf32>, vector<8x384xf32> -> vector<8x384xf32>
    %42 = arith.addf %37, %41 : vector<8x384xf32>
    %43 = vector.extract_strided_slice %1 {offsets = [0, 38], sizes = [4, 384], strides = [1, 1]} : vector<4x512xf32> to vector<4x384xf32>
    %c8 = arith.constant 8 : index
    %c0_27 = arith.constant 0 : index
    %c0_28 = arith.constant 0 : index
    %44 = vector.load %arg2[%c8, %c0_27, %c0_28] : memref<9x8x4xf32, #tpu.memory_space<vmem>>, vector<1x8x4xf32>
    %45 = vector.shape_cast %44 : vector<1x8x4xf32> to vector<8x4xf32>
    %cst_29 = arith.constant dense<0.000000e+00> : vector<8x384xf32>
    %46 = tpu.matmul %45, %43, %cst_29 {dimension_numbers = #tpu.dot_dimension_numbers<[1], [0], [0], [1], [0, 0, 1, 1], [], []>} : vector<8x4xf32>, vector<4x384xf32>, vector<8x384xf32> -> vector<8x384xf32>
    %47 = arith.addf %42, %46 : vector<8x384xf32>
    %c0_30 = arith.constant 0 : index
    %c0_31 = arith.constant 0 : index
    %48 = vector.load %arg3[%c0_30, %c0_31] : memref<8x1xf32, #tpu.memory_space<vmem>>, vector<8x1xf32>
    %49 = vector.broadcast %48 : vector<8x1xf32> to vector<8x384xf32>
    %50 = arith.addf %47, %49 : vector<8x384xf32>
    %c0_32 = arith.constant 0 : index
    %c0_33 = arith.constant 0 : index
    %51 = vector.load %arg4[%c0_32, %c0_33] : memref<1x384xf32, #tpu.memory_space<vmem>>, vector<1x384xf32>
    %52 = vector.extract_strided_slice %50 {offsets = [4, 0], sizes = [4, 384], strides = [1, 1]} : vector<8x384xf32> to vector<4x384xf32>
    %53 = vector.broadcast %51 : vector<1x384xf32> to vector<4x384xf32>
    %54 = arith.mulf %52, %53 : vector<4x384xf32>
    %cst_34 = arith.constant dense<0.000000e+00> : vector<4xf32>
    %55 = vector.multi_reduction <add>, %54, %cst_34 [1] : vector<4x384xf32> to vector<4xf32>
    %56 = vector.shape_cast %55 : vector<4xf32> to vector<4x1xf32>
    %cst_35 = arith.constant 3.906250e-03 : f32
    %57 = vector.broadcast %cst_35 : f32 to vector<4x1xf32>
    %58 = arith.mulf %56, %57 : vector<4x1xf32>
    %59 = vector.broadcast %58 : vector<4x1xf32> to vector<4x384xf32>
    %60 = arith.subf %52, %59 : vector<4x384xf32>
    %61 = vector.broadcast %51 : vector<1x384xf32> to vector<4x384xf32>
    %62 = arith.mulf %60, %61 : vector<4x384xf32>
    %63 = arith.mulf %62, %62 : vector<4x384xf32>
    %cst_36 = arith.constant dense<0.000000e+00> : vector<4xf32>
    %64 = vector.multi_reduction <add>, %63, %cst_36 [1] : vector<4x384xf32> to vector<4xf32>
    %65 = vector.shape_cast %64 : vector<4xf32> to vector<4x1xf32>
    %cst_37 = arith.constant 3.906250e-03 : f32
    %66 = vector.broadcast %cst_37 : f32 to vector<4x1xf32>
    %67 = arith.mulf %65, %66 : vector<4x1xf32>
    %68 = vector.broadcast %58 : vector<4x1xf32> to vector<4x384xf32>
    %69 = arith.subf %52, %68 : vector<4x384xf32>
    %cst_38 = arith.constant 9.99999974E-6 : f32
    %70 = vector.broadcast %cst_38 : f32 to vector<4x1xf32>
    %71 = arith.addf %67, %70 : vector<4x1xf32>
    %72 = math.rsqrt %71 : vector<4x1xf32>
    %73 = vector.broadcast %72 : vector<4x1xf32> to vector<4x384xf32>
    %74 = arith.mulf %69, %73 : vector<4x384xf32>
    %cst_39 = arith.constant 0.000000e+00 : f32
    %75 = vector.broadcast %cst_39 : f32 to vector<4x384xf32>
    %76 = arith.maximumf %74, %75 : vector<4x384xf32>
    %c0_40 = arith.constant 0 : index
    %c4_41 = arith.constant 4 : index
    %c0_42 = arith.constant 0 : index
    %77 = vector.load %arg5[%c0_40, %c4_41, %c0_42] : memref<1x8x384xf32, #tpu.memory_space<vmem>>, vector<1x4x384xf32>
    %78 = vector.shape_cast %77 : vector<1x4x384xf32> to vector<4x384xf32>
    %79 = vector.shape_cast %76 : vector<4x384xf32> to vector<1x4x384xf32>
    tpu.vector_store %arg5[%c0_40, %c4_41, %c0_42], %79 {strides = array<i32>} : memref<1x8x384xf32, #tpu.memory_space<vmem>>, vector<1x4x384xf32>,
    %80 = vector.extract_strided_slice %50 {offsets = [0, 0], sizes = [4, 384], strides = [1, 1]} : vector<8x384xf32> to vector<4x384xf32>
    %c0_43 = arith.constant 0 : index
    %c0_44 = arith.constant 0 : index
    %c0_45 = arith.constant 0 : index
    %81 = vector.load %arg5[%c0_43, %c0_44, %c0_45] : memref<1x8x384xf32, #tpu.memory_space<vmem>>, vector<1x4x384xf32>
    %82 = vector.shape_cast %81 : vector<1x4x384xf32> to vector<4x384xf32>
    %83 = vector.shape_cast %80 : vector<4x384xf32> to vector<1x4x384xf32>
    tpu.vector_store %arg5[%c0_43, %c0_44, %c0_45], %83 {strides = array<i32>} : memref<1x8x384xf32, #tpu.memory_space<vmem>>, vector<1x4x384xf32>,
    %c0_i32 = arith.constant 0 : i32
    %84 = arith.cmpi eq, %arg0, %c0_i32 : i32
    %85 = arith.extui %84 : i1 to i32
    %c0_i32_46 = arith.constant 0 : i32
    %86 = arith.cmpi ne, %85, %c0_i32_46 : i32
    scf.if %86 {
      %cst_57 = arith.constant 0.000000e+00 : f32
      %100 = vector.broadcast %cst_57 : f32 to vector<4x1xf32>
      %c0_58 = arith.constant 0 : index
      %c0_59 = arith.constant 0 : index
      %101 = vector.load %arg6[%c0_58, %c0_59] : memref<4x1xf32, #tpu.memory_space<vmem>>, vector<4x1xf32>
      tpu.vector_store %arg6[%c0_58, %c0_59], %100 {strides = array<i32>} : memref<4x1xf32, #tpu.memory_space<vmem>>, vector<4x1xf32>,
      %cst_60 = arith.constant 0.000000e+00 : f32
      %102 = vector.broadcast %cst_60 : f32 to vector<4x1xf32>
      %c0_61 = arith.constant 0 : index
      %c0_62 = arith.constant 0 : index
      %103 = vector.load %arg7[%c0_61, %c0_62] : memref<4x1xf32, #tpu.memory_space<vmem>>, vector<4x1xf32>
      tpu.vector_store %arg7[%c0_61, %c0_62], %102 {strides = array<i32>} : memref<4x1xf32, #tpu.memory_space<vmem>>, vector<4x1xf32>,
    } else {
    }
    %87 = vector.broadcast %51 : vector<1x384xf32> to vector<4x384xf32>
    %88 = arith.mulf %80, %87 : vector<4x384xf32>
    %c0_47 = arith.constant 0 : index
    %c0_48 = arith.constant 0 : index
    %89 = vector.load %arg6[%c0_47, %c0_48] : memref<4x1xf32, #tpu.memory_space<vmem>>, vector<4x1xf32>
    %cst_49 = arith.constant dense<0.000000e+00> : vector<4xf32>
    %90 = vector.multi_reduction <add>, %88, %cst_49 [1] : vector<4x384xf32> to vector<4xf32>
    %91 = vector.shape_cast %90 : vector<4xf32> to vector<4x1xf32>
    %92 = arith.addf %89, %91 : vector<4x1xf32>
    %c0_50 = arith.constant 0 : index
    %c0_51 = arith.constant 0 : index
    %93 = vector.load %arg6[%c0_50, %c0_51] : memref<4x1xf32, #tpu.memory_space<vmem>>, vector<4x1xf32>
    tpu.vector_store %arg6[%c0_50, %c0_51], %92 {strides = array<i32>} : memref<4x1xf32, #tpu.memory_space<vmem>>, vector<4x1xf32>,
    %c0_52 = arith.constant 0 : index
    %c0_53 = arith.constant 0 : index
    %94 = vector.load %arg7[%c0_52, %c0_53] : memref<4x1xf32, #tpu.memory_space<vmem>>, vector<4x1xf32>
    %95 = arith.mulf %88, %80 : vector<4x384xf32>
    %cst_54 = arith.constant dense<0.000000e+00> : vector<4xf32>
    %96 = vector.multi_reduction <add>, %95, %cst_54 [1] : vector<4x384xf32> to vector<4xf32>
    %97 = vector.shape_cast %96 : vector<4xf32> to vector<4x1xf32>
    %98 = arith.addf %94, %97 : vector<4x1xf32>
    %c0_55 = arith.constant 0 : index
    %c0_56 = arith.constant 0 : index
    %99 = vector.load %arg7[%c0_55, %c0_56] : memref<4x1xf32, #tpu.memory_space<vmem>>, vector<4x1xf32>
    tpu.vector_store %arg7[%c0_55, %c0_56], %98 {strides = array<i32>} : memref<4x1xf32, #tpu.memory_space<vmem>>, vector<4x1xf32>,
    return
  }
  func.func @transform_0(%arg0: i32) -> (i32, i32, i32) {
    %c0_i32 = arith.constant 0 : i32
    %c0_i32_0 = arith.constant 0 : i32
    %c0_i32_1 = arith.constant 0 : i32
    return %arg0, %c0_i32, %c0_i32_0 : i32, i32, i32
  }
  func.func @transform_1(%arg0: i32) -> (i32, i32, i32) {
    %c0_i32 = arith.constant 0 : i32
    %c0_i32_0 = arith.constant 0 : i32
    %c0_i32_1 = arith.constant 0 : i32
    %c0_i32_2 = arith.constant 0 : i32
    return %c0_i32, %c0_i32_0, %c0_i32_1 : i32, i32, i32
  }
  func.func @transform_2(%arg0: i32) -> (i32, i32) {
    %c0_i32 = arith.constant 0 : i32
    %c0_i32_0 = arith.constant 0 : i32
    %c0_i32_1 = arith.constant 0 : i32
    return %c0_i32, %c0_i32_0 : i32, i32
  }
  func.func @transform_3(%arg0: i32) -> (i32, i32) {
    %c0_i32 = arith.constant 0 : i32
    %c0_i32_0 = arith.constant 0 : i32
    %c0_i32_1 = arith.constant 0 : i32
    return %c0_i32, %c0_i32_0 : i32, i32
  }
  func.func @transform_4(%arg0: i32) -> (i32, i32, i32) {
    %c0_i32 = arith.constant 0 : i32
    %c0_i32_0 = arith.constant 0 : i32
    %c0_i32_1 = arith.constant 0 : i32
    return %arg0, %c0_i32, %c0_i32_0 : i32, i32, i32
  }
  func.func @transform_5(%arg0: i32) -> (i32, i32) {
    %c0_i32 = arith.constant 0 : i32
    %c0_i32_0 = arith.constant 0 : i32
    %c0_i32_1 = arith.constant 0 : i32
    return %c0_i32, %c0_i32_0 : i32, i32
  }
  func.func @transform_6(%arg0: i32) -> (i32, i32) {
    %c0_i32 = arith.constant 0 : i32
    %c0_i32_0 = arith.constant 0 : i32
    %c0_i32_1 = arith.constant 0 : i32
    return %c0_i32, %c0_i32_0 : i32, i32
  }
}

module attributes {stable_mosaic.version = 11 : i64} {
  func.func @_bn_finalize_kernel(%arg0: i32, %arg1: memref<1x8x384xf32, #tpu.memory_space<vmem>>, %arg2: memref<4x1xf32, #tpu.memory_space<vmem>>, %arg3: memref<4x1xf32, #tpu.memory_space<vmem>>, %arg4: memref<4x1xf32, #tpu.memory_space<vmem>>, %arg5: memref<4x1xf32, #tpu.memory_space<vmem>>, %arg6: memref<1x8x384xf32, #tpu.memory_space<vmem>>) attributes {dimension_semantics = [#tpu.dimension_semantics<parallel>], iteration_bounds = array<i64: 2>, scalar_prefetch = 0 : i64, scratch_operands = 0 : i64, tpu.core_type = #tpu.core_type<tc>, window_params = [{transform_indices = @transform_0, window_bounds = array<i64: 1, 8, 384>}, {pipeline_mode = #tpu.pipeline_mode<synchronous>, transform_indices = @transform_1, window_bounds = array<i64: 4, 1>}, {pipeline_mode = #tpu.pipeline_mode<synchronous>, transform_indices = @transform_2, window_bounds = array<i64: 4, 1>}, {pipeline_mode = #tpu.pipeline_mode<synchronous>, transform_indices = @transform_3, window_bounds = array<i64: 4, 1>}, {pipeline_mode = #tpu.pipeline_mode<synchronous>, transform_indices = @transform_4, window_bounds = array<i64: 4, 1>}, {transform_indices = @transform_5, window_bounds = array<i64: 1, 8, 384>}]} {
    %c0 = arith.constant 0 : index
    %c0_0 = arith.constant 0 : index
    %c0_1 = arith.constant 0 : index
    %0 = vector.load %arg1[%c0, %c0_0, %c0_1] : memref<1x8x384xf32, #tpu.memory_space<vmem>>, vector<1x8x384xf32>
    %1 = vector.shape_cast %0 : vector<1x8x384xf32> to vector<8x384xf32>
    %c0_2 = arith.constant 0 : index
    %c0_3 = arith.constant 0 : index
    %2 = vector.load %arg2[%c0_2, %c0_3] : memref<4x1xf32, #tpu.memory_space<vmem>>, vector<4x1xf32>
    %cst = arith.constant 0.001953125 : f32
    %3 = vector.broadcast %cst : f32 to vector<4x1xf32>
    %4 = arith.mulf %2, %3 : vector<4x1xf32>
    %c0_4 = arith.constant 0 : index
    %c0_5 = arith.constant 0 : index
    %5 = vector.load %arg3[%c0_4, %c0_5] : memref<4x1xf32, #tpu.memory_space<vmem>>, vector<4x1xf32>
    %cst_6 = arith.constant 0.001953125 : f32
    %6 = vector.broadcast %cst_6 : f32 to vector<4x1xf32>
    %7 = arith.mulf %5, %6 : vector<4x1xf32>
    %8 = arith.mulf %4, %4 : vector<4x1xf32>
    %9 = arith.subf %7, %8 : vector<4x1xf32>
    %c0_7 = arith.constant 0 : index
    %c0_8 = arith.constant 0 : index
    %10 = vector.load %arg4[%c0_7, %c0_8] : memref<4x1xf32, #tpu.memory_space<vmem>>, vector<4x1xf32>
    %cst_9 = arith.constant 9.99999974E-6 : f32
    %11 = vector.broadcast %cst_9 : f32 to vector<4x1xf32>
    %12 = arith.addf %9, %11 : vector<4x1xf32>
    %13 = math.rsqrt %12 : vector<4x1xf32>
    %14 = arith.mulf %10, %13 : vector<4x1xf32>
    %c0_10 = arith.constant 0 : index
    %c0_11 = arith.constant 0 : index
    %15 = vector.load %arg5[%c0_10, %c0_11] : memref<4x1xf32, #tpu.memory_space<vmem>>, vector<4x1xf32>
    %16 = arith.mulf %4, %14 : vector<4x1xf32>
    %17 = arith.subf %15, %16 : vector<4x1xf32>
    %18 = vector.extract_strided_slice %1 {offsets = [0, 0], sizes = [4, 384], strides = [1, 1]} : vector<8x384xf32> to vector<4x384xf32>
    %19 = vector.broadcast %14 : vector<4x1xf32> to vector<4x384xf32>
    %20 = arith.mulf %18, %19 : vector<4x384xf32>
    %21 = vector.broadcast %17 : vector<4x1xf32> to vector<4x384xf32>
    %22 = arith.addf %20, %21 : vector<4x384xf32>
    %cst_12 = arith.constant 0.000000e+00 : f32
    %23 = vector.broadcast %cst_12 : f32 to vector<4x384xf32>
    %24 = arith.maximumf %22, %23 : vector<4x384xf32>
    %c0_13 = arith.constant 0 : index
    %c0_14 = arith.constant 0 : index
    %c0_15 = arith.constant 0 : index
    %25 = vector.load %arg6[%c0_13, %c0_14, %c0_15] : memref<1x8x384xf32, #tpu.memory_space<vmem>>, vector<1x4x384xf32>
    %26 = vector.shape_cast %25 : vector<1x4x384xf32> to vector<4x384xf32>
    %27 = vector.shape_cast %24 : vector<4x384xf32> to vector<1x4x384xf32>
    tpu.vector_store %arg6[%c0_13, %c0_14, %c0_15], %27 {strides = array<i32>} : memref<1x8x384xf32, #tpu.memory_space<vmem>>, vector<1x4x384xf32>,
    %28 = vector.extract_strided_slice %1 {offsets = [4, 0], sizes = [4, 384], strides = [1, 1]} : vector<8x384xf32> to vector<4x384xf32>
    %c0_16 = arith.constant 0 : index
    %c4 = arith.constant 4 : index
    %c0_17 = arith.constant 0 : index
    %29 = vector.load %arg6[%c0_16, %c4, %c0_17] : memref<1x8x384xf32, #tpu.memory_space<vmem>>, vector<1x4x384xf32>
    %30 = vector.shape_cast %29 : vector<1x4x384xf32> to vector<4x384xf32>
    %31 = vector.shape_cast %28 : vector<4x384xf32> to vector<1x4x384xf32>
    tpu.vector_store %arg6[%c0_16, %c4, %c0_17], %31 {strides = array<i32>} : memref<1x8x384xf32, #tpu.memory_space<vmem>>, vector<1x4x384xf32>,
    return
  }
  func.func @transform_0(%arg0: i32) -> (i32, i32, i32) {
    %c0_i32 = arith.constant 0 : i32
    %c0_i32_0 = arith.constant 0 : i32
    %c0_i32_1 = arith.constant 0 : i32
    return %arg0, %c0_i32, %c0_i32_0 : i32, i32, i32
  }
  func.func @transform_1(%arg0: i32) -> (i32, i32) {
    %c0_i32 = arith.constant 0 : i32
    %c0_i32_0 = arith.constant 0 : i32
    %c0_i32_1 = arith.constant 0 : i32
    return %c0_i32, %c0_i32_0 : i32, i32
  }
  func.func @transform_2(%arg0: i32) -> (i32, i32) {
    %c0_i32 = arith.constant 0 : i32
    %c0_i32_0 = arith.constant 0 : i32
    %c0_i32_1 = arith.constant 0 : i32
    return %c0_i32, %c0_i32_0 : i32, i32
  }
  func.func @transform_3(%arg0: i32) -> (i32, i32) {
    %c0_i32 = arith.constant 0 : i32
    %c0_i32_0 = arith.constant 0 : i32
    %c0_i32_1 = arith.constant 0 : i32
    return %c0_i32, %c0_i32_0 : i32, i32
  }
  func.func @transform_4(%arg0: i32) -> (i32, i32) {
    %c0_i32 = arith.constant 0 : i32
    %c0_i32_0 = arith.constant 0 : i32
    %c0_i32_1 = arith.constant 0 : i32
    return %c0_i32, %c0_i32_0 : i32, i32
  }
  func.func @transform_5(%arg0: i32) -> (i32, i32, i32) {
    %c0_i32 = arith.constant 0 : i32
    %c0_i32_0 = arith.constant 0 : i32
    %c0_i32_1 = arith.constant 0 : i32
    return %arg0, %c0_i32, %c0_i32_0 : i32, i32, i32
  }
}

</mosaic_0001>

<llo_original>
// kernel: conv2d_ibnorm_relu.3
$region0: #{conv2d_ibnorm_relu.3}
  #allocation0 [shape = 'u32[]', space=smem, size = 0x4, offset = 0x4, fixed_abs, tag = 'smem constant byte address 0x4 - core index']
  #allocation1 [shape = 'u32[144,128]{1,0:T(1,128)}', space=vmem, size = 0x12000, scoped, tag = 'internal scratch']
  %s0 = inlined_call_operand.vmem [shape: f32[2,8,384], index: 0, kind: input, shape index: {}]
  %s1 = inlined_call_operand.vmem [shape: f32[4,1], index: 1, kind: input, shape index: {}]
  %s2 = inlined_call_operand.vmem [shape: f32[4,1], index: 2, kind: input, shape index: {}]
  %s3 = inlined_call_operand.vmem [shape: f32[4,1], index: 3, kind: input, shape index: {}]
  %s4 = inlined_call_operand.vmem [shape: f32[4,1], index: 4, kind: input, shape index: {}]
  %s5 = inlined_call_operand.vmem [shape: f32[2,8,384], index: 5, kind: output, shape index: {}]
  %s6 = sld [smem:[#allocation0]]
  $region53: #{conv2d_ibnorm_relu.3} parent=0
    _
  %s8 = ssub.s32 1, %s6
  %s9 = scalar_select 0, %s8, %s6
  loop: start=0, step=1, limit=4
  $region2: #{conv2d_ibnorm_relu.3} parent=0 // loop_pre_header
    _
  $region3: #{conv2d_ibnorm_relu.3} parent=0 // loop_header
    %s11 = sphi 0, %s15
    %p12 = scmp.ge.s32.totalorder %s11, 4
    %s21 = sphi 0, %s23
    %s24 = sphi 0, %s21
    %s25 = sphi 0, %s24
    %s41 = sphi 0, %s25
    %s45 = sphi 0, %s45
    %s47 = sphi 0, %s45
    %s48 = sphi 0, %s47
    %s62 = sphi 0, %s48
    %s66 = sphi 0, %s66
    %s68 = sphi 0, %s66
    %s69 = sphi 0, %s68
    %s83 = sphi 0, %s69
    %s87 = sphi 0, %s87
    %s89 = sphi 0, %s87
    %s90 = sphi 0, %s89
    %s104 = sphi 0, %s90
    %s108 = sphi 0, %s108
    %s110 = sphi 0, %s108
    %s111 = sphi 0, %s110
    %s125 = sphi 0, %s111
    %s131 = sphi 0, %s133
    %s134 = sphi 0, %s131
    %s135 = sphi 0, %s134
    %s151 = sphi 0, %s135
  $region4: #{conv2d_ibnorm_relu.3} parent=0 // loop_header_branch
    %14 = sbr.rel (%p12) target = $region8
  $region5: #{conv2d_ibnorm_relu.3} parent=0 // loop_body
    %s16 = ssub.s32 %s11, 1
    %s17 = ssub.s32 %s11, 2
    %s18 = sadd.s32 %s11, 1
    %s19 = ssub.s32 %s11, %s18
    %p20 = scmp.eq.s32.totalorder %s19, 0
    %s22 = sadd.s32 %s21, 1
    %s23 = scalar_select %p20, %s21, %s22
    %p26 = pneg %p20
    %p27 = scmp.eq.s32.totalorder %s11, 1
    %p28 = por %p26, %p27
    %p29 = scmp.ne.s32.totalorder %s21, %s24
    %p30 = scmp.eq.s32.totalorder %s11, 0
    %p31 = por %p29, %p30
    %p32 = scmp.ne.s32.totalorder %s21, %s24
    %p33 = scmp.eq.s32.totalorder %s16, 1
    %p34 = por %p32, %p33
    %p35 = scmp.ne.s32.totalorder %s24, %s25
    %p36 = scmp.eq.s32.totalorder %s16, 0
    %p37 = por %p35, %p36
    %p38 = scmp.ne.s32.totalorder %s24, %s25
    %p39 = scmp.eq.s32.totalorder %s17, 1
    %p40 = por %p38, %p39
    %p42 = scmp.ne.s32.totalorder %s25, %s41
    %p43 = scmp.eq.s32.totalorder %s17, 0
    %p44 = por %p42, %p43
    %s46 = sadd.s32 %s45, 1
    %p49 = scmp.eq.s32.totalorder %s11, 1
    %p50 = scmp.ne.s32.totalorder %s45, %s47
    %p51 = scmp.eq.s32.totalorder %s11, 0
    %p52 = por %p50, %p51
    %p53 = scmp.ne.s32.totalorder %s45, %s47
    %p54 = scmp.eq.s32.totalorder %s16, 1
    %p55 = por %p53, %p54
    %p56 = scmp.ne.s32.totalorder %s47, %s48
    %p57 = scmp.eq.s32.totalorder %s16, 0
    %p58 = por %p56, %p57
    %p59 = scmp.ne.s32.totalorder %s47, %s48
    %p60 = scmp.eq.s32.totalorder %s17, 1
    %p61 = por %p59, %p60
    %p63 = scmp.ne.s32.totalorder %s48, %s62
    %p64 = scmp.eq.s32.totalorder %s17, 0
    %p65 = por %p63, %p64
    %s67 = sadd.s32 %s66, 1
    %p70 = scmp.eq.s32.totalorder %s11, 1
    %p71 = scmp.ne.s32.totalorder %s66, %s68
    %p72 = scmp.eq.s32.totalorder %s11, 0
    %p73 = por %p71, %p72
    %p74 = scmp.ne.s32.totalorder %s66, %s68
    %p75 = scmp.eq.s32.totalorder %s16, 1
    %p76 = por %p74, %p75
    %p77 = scmp.ne.s32.totalorder %s68, %s69
    %p78 = scmp.eq.s32.totalorder %s16, 0
    %p79 = por %p77, %p78
    %p80 = scmp.ne.s32.totalorder %s68, %s69
    %p81 = scmp.eq.s32.totalorder %s17, 1
    %p82 = por %p80, %p81
    %p84 = scmp.ne.s32.totalorder %s69, %s83
    %p85 = scmp.eq.s32.totalorder %s17, 0
    %p86 = por %p84, %p85
    %s88 = sadd.s32 %s87, 1
    %p91 = scmp.eq.s32.totalorder %s11, 1
    %p92 = scmp.ne.s32.totalorder %s87, %s89
    %p93 = scmp.eq.s32.totalorder %s11, 0
    %p94 = por %p92, %p93
    %p95 = scmp.ne.s32.totalorder %s87, %s89
    %p96 = scmp.eq.s32.totalorder %s16, 1
    %p97 = por %p95, %p96
    %p98 = scmp.ne.s32.totalorder %s89, %s90
    %p99 = scmp.eq.s32.totalorder %s16, 0
    %p100 = por %p98, %p99
    %p101 = scmp.ne.s32.totalorder %s89, %s90
    %p102 = scmp.eq.s32.totalorder %s17, 1
    %p103 = por %p101, %p102
    %p105 = scmp.ne.s32.totalorder %s90, %s104
    %p106 = scmp.eq.s32.totalorder %s17, 0
    %p107 = por %p105, %p106
    %s109 = sadd.s32 %s108, 1
    %p112 = scmp.eq.s32.totalorder %s11, 1
    %p113 = scmp.ne.s32.totalorder %s108, %s110
    %p114 = scmp.eq.s32.totalorder %s11, 0
    %p115 = por %p113, %p114
    %p116 = scmp.ne.s32.totalorder %s108, %s110
    %p117 = scmp.eq.s32.totalorder %s16, 1
    %p118 = por %p116, %p117
    %p119 = scmp.ne.s32.totalorder %s110, %s111
    %p120 = scmp.eq.s32.totalorder %s16, 0
    %p121 = por %p119, %p120
    %p122 = scmp.ne.s32.totalorder %s110, %s111
    %p123 = scmp.eq.s32.totalorder %s17, 1
    %p124 = por %p122, %p123
    %p126 = scmp.ne.s32.totalorder %s111, %s125
    %p127 = scmp.eq.s32.totalorder %s17, 0
    %p128 = por %p126, %p127
    %s129 = ssub.s32 %s11, %s18
    %p130 = scmp.eq.s32.totalorder %s129, 0
    %s132 = sadd.s32 %s131, 1
    %s133 = scalar_select %p130, %s131, %s132
    %p136 = pneg %p130
    %p137 = scmp.eq.s32.totalorder %s11, 1
    %p138 = por %p136, %p137
    %p139 = scmp.ne.s32.totalorder %s131, %s134
    %p140 = scmp.eq.s32.totalorder %s11, 0
    %p141 = por %p139, %p140
    %p142 = scmp.ne.s32.totalorder %s131, %s134
    %p143 = scmp.eq.s32.totalorder %s16, 1
    %p144 = por %p142, %p143
    %p145 = scmp.ne.s32.totalorder %s134, %s135
    %p146 = scmp.eq.s32.totalorder %s16, 0
    %p147 = por %p145, %p146
    %p148 = scmp.ne.s32.totalorder %s134, %s135
    %p149 = scmp.eq.s32.totalorder %s17, 1
    %p150 = por %p148, %p149
    %p152 = scmp.ne.s32.totalorder %s135, %s151
    %p153 = scmp.eq.s32.totalorder %s17, 0
    %p154 = por %p152, %p153
    %p155 = scmp.le.s32.totalorder 1, %s11
    %p156 = scmp.lt.s32.totalorder %s11, 3
    %p157 = pnand %p155, %p156
    %p158 = pneg %p157
    // Predicated region
    $region9: #{conv2d_ibnorm_relu.3} parent=5 // pred_check
      _
    $region10: #{conv2d_ibnorm_relu.3} parent=5 // pred_check_branch
      %160 = sbr.rel (%p157) target = $region12
    $region11: #{conv2d_ibnorm_relu.3} parent=5 // pred_region
      %s161 = ssub.s32 %s11, 1
      // Predicated region
      $region13: #{conv2d_ibnorm_relu.3} parent=11 // pred_check
        %p162 = pneg %p58
      $region14: #{conv2d_ibnorm_relu.3} parent=11 // pred_check_branch
        %164 = sbr.rel (%p162) target = $region16
      $region15: #{conv2d_ibnorm_relu.3} parent=11 // pred_region
        _
      $region16: #{conv2d_ibnorm_relu.3} parent=11 // pred_fallthru
        _
      // Predicated region
      $region17: #{conv2d_ibnorm_relu.3} parent=11 // pred_check
        %p165 = pneg %p79
      $region18: #{conv2d_ibnorm_relu.3} parent=11 // pred_check_branch
        %167 = sbr.rel (%p165) target = $region20
      $region19: #{conv2d_ibnorm_relu.3} parent=11 // pred_region
        _
      $region20: #{conv2d_ibnorm_relu.3} parent=11 // pred_fallthru
        _
      // Predicated region
      $region21: #{conv2d_ibnorm_relu.3} parent=11 // pred_check
        %p168 = pneg %p100
      $region22: #{conv2d_ibnorm_relu.3} parent=11 // pred_check_branch
        %170 = sbr.rel (%p168) target = $region24
      $region23: #{conv2d_ibnorm_relu.3} parent=11 // pred_region
        _
      $region24: #{conv2d_ibnorm_relu.3} parent=11 // pred_fallthru
        _
      // Predicated region
      $region25: #{conv2d_ibnorm_relu.3} parent=11 // pred_check
        %p171 = pneg %p121
      $region26: #{conv2d_ibnorm_relu.3} parent=11 // pred_check_branch
        %173 = sbr.rel (%p171) target = $region28
      $region27: #{conv2d_ibnorm_relu.3} parent=11 // pred_region
        _
      $region28: #{conv2d_ibnorm_relu.3} parent=11 // pred_fallthru
        _
    $region12: #{conv2d_ibnorm_relu.3} parent=5 // pred_fallthru
      _
    %p174 = scmp.lt.s32.totalorder %s11, 2
    // Predicated region
    $region29: #{conv2d_ibnorm_relu.3} parent=5 // pred_check
      %p175 = pneg %p174
    $region30: #{conv2d_ibnorm_relu.3} parent=5 // pred_check_branch
      %177 = sbr.rel (%p175) target = $region32
    $region31: #{conv2d_ibnorm_relu.3} parent=5 // pred_region
      // Predicated region
      $region33: #{conv2d_ibnorm_relu.3} parent=31 // pred_check
        %p178 = pneg %p31
      $region34: #{conv2d_ibnorm_relu.3} parent=31 // pred_check_branch
        %180 = sbr.rel (%p178) target = $region36
      $region35: #{conv2d_ibnorm_relu.3} parent=31 // pred_region
        %p181 = scmp.lt.s32.totalorder %s11, 1
        %s182 = scalar_select %p181, %s11, 1
        %s183 = smul.addr %s182, 3
        %s184 = smul.addr %s183, 8
        %s185 = scalar_lea.vmem %s0, %s184
      $region36: #{conv2d_ibnorm_relu.3} parent=31 // pred_fallthru
        _
    $region32: #{conv2d_ibnorm_relu.3} parent=5 // pred_fallthru
      _
    %p186 = scmp.le.s32.totalorder 1, %s11
    %p187 = scmp.lt.s32.totalorder %s11, 3
    %p188 = pnand %p186, %p187
    %p189 = pneg %p188
    // Predicated region
    $region37: #{conv2d_ibnorm_relu.3} parent=5 // pred_check
      _
    $region38: #{conv2d_ibnorm_relu.3} parent=5 // pred_check_branch
      %191 = sbr.rel (%p188) target = $region40
    $region39: #{conv2d_ibnorm_relu.3} parent=5 // pred_region
      %s192 = ssub.s32 %s11, 1
      %p193 = scmp.lt.s32.totalorder %s16, 1
      %s194 = scalar_select %p193, %s16, 1
      %s195 = smul.addr %s194, 3
      %s196 = smul.addr %s195, 8
      %s197 = scalar_lea.vmem %s0, %s196
      %p198 = pneg %p37
      %p199 = pneg %p34
      %p200 = pneg %p58
      %p201 = pneg %p55
      %p202 = pneg %p79
      %p203 = pneg %p76
      %p204 = pneg %p100
      %p205 = pneg %p97
      %p206 = pneg %p121
      %p207 = pneg %p118
      %p208 = pneg %p147
      %p209 = pneg %p144
      %p210 = scmp.lt.s32.totalorder %s16, 1
      %s211 = scalar_select %p210, %s16, 1
      %s212 = smul.addr %s211, 3
      %s213 = smul.addr %s212, 8
      %s214 = scalar_lea.vmem %s5, %s213
      %p215 = scmp.lt.s32.totalorder %s16, 1
      %s216 = scalar_select %p215, %s16, 1
      %s217 = smul.addr %s216, 3
      %s218 = smul.addr %s217, 8
      %s219 = scalar_lea.vmem %s0, %s218
      %p220 = scmp.lt.s32.totalorder %s16, 1
      %s221 = scalar_select %p220, %s16, 1
      %s222 = smul.addr %s221, 3
      %s223 = smul.addr %s222, 8
      %s224 = scalar_lea.vmem %s5, %s223
      %v225 = vld [vmem:[%s219] sm:$0xff]
      %v226 = vld [vmem:[%s219 + $0x8] sm:$0xff]
      %v227 = vld [vmem:[%s219 + $0x10] sm:$0xff]
      %v228 = vld [vmem:[%s1] sm:$0xf]
      %v229 = vmul.f32 %v228, 0.001953125
      %v230 = vld [vmem:[%s2] sm:$0xf]
      %v231 = vmul.f32 %v230, 0.001953125
      %v232 = vmul.f32 %v229, %v229
      %v233 = vsub.f32 %v231, %v232
      %v234 = vld [vmem:[%s3] sm:$0xf]
      %v235 = vadd.f32 %v233, 1e-05
      %v236 = vrsqrt.pop %v235
      %v237 = vmul.f32 %v234, %v236
      %v238 = vld [vmem:[%s4] sm:$0xf]
      %v239 = vmul.f32 %v229, %v237
      %v240 = vsub.f32 %v238, %v239
      %242 = vset.pattern.permute.xlu0 0
      %243 = vperm.xlu0 %242, %v237
      %v244 = vpop.permute.xlu0 %243
      %v246 = vmul.f32 %v225, %v244
      %v247 = vmul.f32 %v226, %v244
      %v248 = vmul.f32 %v227, %v244
      %250 = vset.pattern.permute.xlu0 0
      %251 = vperm.xlu0 %250, %v240
      %v252 = vpop.permute.xlu0 %251
      %v254 = vadd.f32 %v246, %v252
      %v255 = vadd.f32 %v247, %v252
      %v256 = vadd.f32 %v248, %v252
      %v257 = vmax.f32 %v254, 0.0
      %v258 = vmax.f32 %v255, 0.0
      %v259 = vmax.f32 %v256, 0.0
      %260 = vst [vmem:[%s224] sm:$0xf] %v257
      %261 = vst [vmem:[%s224 + $0x8] sm:$0xf] %v258
      %262 = vst [vmem:[%s224 + $0x10] sm:$0xf] %v259
      %263 = vst [vmem:[%s224] sm:$0xf0] %v225
      %264 = vst [vmem:[%s224 + $0x8] sm:$0xf0] %v226
      %265 = vst [vmem:[%s224 + $0x10] sm:$0xf0] %v227
      %p266 = scmp.lt.s32.totalorder %s16, 1
      %s267 = scalar_select %p266, %s16, 1
      %s268 = smul.addr %s267, 3
      %s269 = smul.addr %s268, 8
      %s270 = scalar_lea.vmem %s5, %s269
      // Predicated region
      $region41: #{conv2d_ibnorm_relu.3} parent=39 // pred_check
        %p271 = pneg %p144
      $region42: #{conv2d_ibnorm_relu.3} parent=39 // pred_check_branch
        %273 = sbr.rel (%p271) target = $region44
      $region43: #{conv2d_ibnorm_relu.3} parent=39 // pred_region
        _
      $region44: #{conv2d_ibnorm_relu.3} parent=39 // pred_fallthru
        _
    $region40: #{conv2d_ibnorm_relu.3} parent=5 // pred_fallthru
      _
    %p274 = scmp.le.s32.totalorder 2, %s11
    // Predicated region
    $region45: #{conv2d_ibnorm_relu.3} parent=5 // pred_check
      %p275 = pneg %p274
    $region46: #{conv2d_ibnorm_relu.3} parent=5 // pred_check_branch
      %277 = sbr.rel (%p275) target = $region48
    $region47: #{conv2d_ibnorm_relu.3} parent=5 // pred_region
      %s278 = ssub.s32 %s11, 2
      // Predicated region
      $region49: #{conv2d_ibnorm_relu.3} parent=47 // pred_check
        %p279 = pneg %p150
      $region50: #{conv2d_ibnorm_relu.3} parent=47 // pred_check_branch
        %281 = sbr.rel (%p279) target = $region52
      $region51: #{conv2d_ibnorm_relu.3} parent=47 // pred_region
        %p282 = scmp.lt.s32.totalorder %s17, 1
        %s283 = scalar_select %p282, %s17, 1
        %s284 = smul.addr %s283, 3
        %s285 = smul.addr %s284, 8
        %s286 = scalar_lea.vmem %s5, %s285
      $region52: #{conv2d_ibnorm_relu.3} parent=47 // pred_fallthru
        _
    $region48: #{conv2d_ibnorm_relu.3} parent=5 // pred_fallthru
      _
  $region6: #{conv2d_ibnorm_relu.3} parent=0 // loop_footer
    %s15 = sadd.s32 1, %s11
  $region7: #{conv2d_ibnorm_relu.3} parent=0 // loop_footer_branch
    %10 = sbr.rel target = $region3
  $region8: #{conv2d_ibnorm_relu.3} parent=0 // loop_exit
    _

// kernel: conv2d_ibnorm_relu.2
$region0: #{conv2d_ibnorm_relu.2}
  #allocation0 [shape = 'u32[]', space=smem, size = 0x4, offset = 0x4, fixed_abs, tag = 'smem constant byte address 0x4 - core index']
  #allocation1 [shape = 'u32[144,128]{1,0:T(1,128)}', space=vmem, size = 0x12000, scoped, tag = 'internal scratch']
  %s0 = inlined_call_operand.vmem [shape: f32[2,4,512], index: 0, kind: input, shape index: {}]
  %s1 = inlined_call_operand.vmem [shape: f32[9,8,4], index: 1, kind: input, shape index: {}]
  %s2 = inlined_call_operand.vmem [shape: f32[8,1], index: 2, kind: input, shape index: {}]
  %s3 = inlined_call_operand.vmem [shape: f32[1,384], index: 3, kind: input, shape index: {}]
  %s4 = inlined_call_operand.vmem [shape: f32[2,8,384], index: 4, kind: output, shape index: {0}]
  %s5 = inlined_call_operand.vmem [shape: f32[4,1], index: 5, kind: output, shape index: {1}]
  %s6 = inlined_call_operand.vmem [shape: f32[4,1], index: 6, kind: output, shape index: {2}]
  %7 = xla_tuple %s4, %s5, %s6
  %s8 = sld [smem:[#allocation0]]
  $region69: #{conv2d_ibnorm_relu.2} parent=0
    _
  %s10 = ssub.s32 1, %s8
  %s11 = scalar_select 0, %s10, %s8
  loop: start=0, step=1, limit=4
  $region2: #{conv2d_ibnorm_relu.2} parent=0 // loop_pre_header
    _
  $region3: #{conv2d_ibnorm_relu.2} parent=0 // loop_header
    %s13 = sphi 0, %s17
    %p14 = scmp.ge.s32.totalorder %s13, 4
    %s23 = sphi 0, %s25
    %s26 = sphi 0, %s23
    %s27 = sphi 0, %s26
    %s43 = sphi 0, %s27
    %s47 = sphi 0, %s47
    %s49 = sphi 0, %s47
    %s50 = sphi 0, %s49
    %s64 = sphi 0, %s50
    %s68 = sphi 0, %s68
    %s70 = sphi 0, %s68
    %s71 = sphi 0, %s70
    %s85 = sphi 0, %s71
    %s89 = sphi 0, %s89
    %s91 = sphi 0, %s89
    %s92 = sphi 0, %s91
    %s106 = sphi 0, %s92
    %s112 = sphi 0, %s114
    %s115 = sphi 0, %s112
    %s116 = sphi 0, %s115
    %s132 = sphi 0, %s116
    %s136 = sphi 0, %s136
    %s138 = sphi 0, %s136
    %s139 = sphi 0, %s138
    %s153 = sphi 0, %s139
    %s157 = sphi 0, %s157
    %s159 = sphi 0, %s157
    %s160 = sphi 0, %s159
    %s174 = sphi 0, %s160
  $region4: #{conv2d_ibnorm_relu.2} parent=0 // loop_header_branch
    %16 = sbr.rel (%p14) target = $region8
  $region5: #{conv2d_ibnorm_relu.2} parent=0 // loop_body
    %s18 = ssub.s32 %s13, 1
    %s19 = ssub.s32 %s13, 2
    %s20 = sadd.s32 %s13, 1
    %s21 = ssub.s32 %s13, %s20
    %p22 = scmp.eq.s32.totalorder %s21, 0
    %s24 = sadd.s32 %s23, 1
    %s25 = scalar_select %p22, %s23, %s24
    %p28 = pneg %p22
    %p29 = scmp.eq.s32.totalorder %s13, 1
    %p30 = por %p28, %p29
    %p31 = scmp.ne.s32.totalorder %s23, %s26
    %p32 = scmp.eq.s32.totalorder %s13, 0
    %p33 = por %p31, %p32
    %p34 = scmp.ne.s32.totalorder %s23, %s26
    %p35 = scmp.eq.s32.totalorder %s18, 1
    %p36 = por %p34, %p35
    %p37 = scmp.ne.s32.totalorder %s26, %s27
    %p38 = scmp.eq.s32.totalorder %s18, 0
    %p39 = por %p37, %p38
    %p40 = scmp.ne.s32.totalorder %s26, %s27
    %p41 = scmp.eq.s32.totalorder %s19, 1
    %p42 = por %p40, %p41
    %p44 = scmp.ne.s32.totalorder %s27, %s43
    %p45 = scmp.eq.s32.totalorder %s19, 0
    %p46 = por %p44, %p45
    %s48 = sadd.s32 %s47, 1
    %p51 = scmp.eq.s32.totalorder %s13, 1
    %p52 = scmp.ne.s32.totalorder %s47, %s49
    %p53 = scmp.eq.s32.totalorder %s13, 0
    %p54 = por %p52, %p53
    %p55 = scmp.ne.s32.totalorder %s47, %s49
    %p56 = scmp.eq.s32.totalorder %s18, 1
    %p57 = por %p55, %p56
    %p58 = scmp.ne.s32.totalorder %s49, %s50
    %p59 = scmp.eq.s32.totalorder %s18, 0
    %p60 = por %p58, %p59
    %p61 = scmp.ne.s32.totalorder %s49, %s50
    %p62 = scmp.eq.s32.totalorder %s19, 1
    %p63 = por %p61, %p62
    %p65 = scmp.ne.s32.totalorder %s50, %s64
    %p66 = scmp.eq.s32.totalorder %s19, 0
    %p67 = por %p65, %p66
    %s69 = sadd.s32 %s68, 1
    %p72 = scmp.eq.s32.totalorder %s13, 1
    %p73 = scmp.ne.s32.totalorder %s68, %s70
    %p74 = scmp.eq.s32.totalorder %s13, 0
    %p75 = por %p73, %p74
    %p76 = scmp.ne.s32.totalorder %s68, %s70
    %p77 = scmp.eq.s32.totalorder %s18, 1
    %p78 = por %p76, %p77
    %p79 = scmp.ne.s32.totalorder %s70, %s71
    %p80 = scmp.eq.s32.totalorder %s18, 0
    %p81 = por %p79, %p80
    %p82 = scmp.ne.s32.totalorder %s70, %s71
    %p83 = scmp.eq.s32.totalorder %s19, 1
    %p84 = por %p82, %p83
    %p86 = scmp.ne.s32.totalorder %s71, %s85
    %p87 = scmp.eq.s32.totalorder %s19, 0
    %p88 = por %p86, %p87
    %s90 = sadd.s32 %s89, 1
    %p93 = scmp.eq.s32.totalorder %s13, 1
    %p94 = scmp.ne.s32.totalorder %s89, %s91
    %p95 = scmp.eq.s32.totalorder %s13, 0
    %p96 = por %p94, %p95
    %p97 = scmp.ne.s32.totalorder %s89, %s91
    %p98 = scmp.eq.s32.totalorder %s18, 1
    %p99 = por %p97, %p98
    %p100 = scmp.ne.s32.totalorder %s91, %s92
    %p101 = scmp.eq.s32.totalorder %s18, 0
    %p102 = por %p100, %p101
    %p103 = scmp.ne.s32.totalorder %s91, %s92
    %p104 = scmp.eq.s32.totalorder %s19, 1
    %p105 = por %p103, %p104
    %p107 = scmp.ne.s32.totalorder %s92, %s106
    %p108 = scmp.eq.s32.totalorder %s19, 0
    %p109 = por %p107, %p108
    %s110 = ssub.s32 %s13, %s20
    %p111 = scmp.eq.s32.totalorder %s110, 0
    %s113 = sadd.s32 %s112, 1
    %s114 = scalar_select %p111, %s112, %s113
    %p117 = pneg %p111
    %p118 = scmp.eq.s32.totalorder %s13, 1
    %p119 = por %p117, %p118
    %p120 = scmp.ne.s32.totalorder %s112, %s115
    %p121 = scmp.eq.s32.totalorder %s13, 0
    %p122 = por %p120, %p121
    %p123 = scmp.ne.s32.totalorder %s112, %s115
    %p124 = scmp.eq.s32.totalorder %s18, 1
    %p125 = por %p123, %p124
    %p126 = scmp.ne.s32.totalorder %s115, %s116
    %p127 = scmp.eq.s32.totalorder %s18, 0
    %p128 = por %p126, %p127
    %p129 = scmp.ne.s32.totalorder %s115, %s116
    %p130 = scmp.eq.s32.totalorder %s19, 1
    %p131 = por %p129, %p130
    %p133 = scmp.ne.s32.totalorder %s116, %s132
    %p134 = scmp.eq.s32.totalorder %s19, 0
    %p135 = por %p133, %p134
    %s137 = sadd.s32 %s136, 1
    %p140 = scmp.eq.s32.totalorder %s13, 1
    %p141 = scmp.ne.s32.totalorder %s136, %s138
    %p142 = scmp.eq.s32.totalorder %s13, 0
    %p143 = por %p141, %p142
    %p144 = scmp.ne.s32.totalorder %s136, %s138
    %p145 = scmp.eq.s32.totalorder %s18, 1
    %p146 = por %p144, %p145
    %p147 = scmp.ne.s32.totalorder %s138, %s139
    %p148 = scmp.eq.s32.totalorder %s18, 0
    %p149 = por %p147, %p148
    %p150 = scmp.ne.s32.totalorder %s138, %s139
    %p151 = scmp.eq.s32.totalorder %s19, 1
    %p152 = por %p150, %p151
    %p154 = scmp.ne.s32.totalorder %s139, %s153
    %p155 = scmp.eq.s32.totalorder %s19, 0
    %p156 = por %p154, %p155
    %s158 = sadd.s32 %s157, 1
    %p161 = scmp.eq.s32.totalorder %s13, 1
    %p162 = scmp.ne.s32.totalorder %s157, %s159
    %p163 = scmp.eq.s32.totalorder %s13, 0
    %p164 = por %p162, %p163
    %p165 = scmp.ne.s32.totalorder %s157, %s159
    %p166 = scmp.eq.s32.totalorder %s18, 1
    %p167 = por %p165, %p166
    %p168 = scmp.ne.s32.totalorder %s159, %s160
    %p169 = scmp.eq.s32.totalorder %s18, 0
    %p170 = por %p168, %p169
    %p171 = scmp.ne.s32.totalorder %s159, %s160
    %p172 = scmp.eq.s32.totalorder %s19, 1
    %p173 = por %p171, %p172
    %p175 = scmp.ne.s32.totalorder %s160, %s174
    %p176 = scmp.eq.s32.totalorder %s19, 0
    %p177 = por %p175, %p176
    %p178 = scmp.le.s32.totalorder 1, %s13
    %p179 = scmp.lt.s32.totalorder %s13, 3
    %p180 = pnand %p178, %p179
    %p181 = pneg %p180
    // Predicated region
    $region9: #{conv2d_ibnorm_relu.2} parent=5 // pred_check
      _
    $region10: #{conv2d_ibnorm_relu.2} parent=5 // pred_check_branch
      %183 = sbr.rel (%p180) target = $region12
    $region11: #{conv2d_ibnorm_relu.2} parent=5 // pred_region
      %s184 = ssub.s32 %s13, 1
      // Predicated region
      $region13: #{conv2d_ibnorm_relu.2} parent=11 // pred_check
        %p185 = pneg %p60
      $region14: #{conv2d_ibnorm_relu.2} parent=11 // pred_check_branch
        %187 = sbr.rel (%p185) target = $region16
      $region15: #{conv2d_ibnorm_relu.2} parent=11 // pred_region
        _
      $region16: #{conv2d_ibnorm_relu.2} parent=11 // pred_fallthru
        _
      // Predicated region
      $region17: #{conv2d_ibnorm_relu.2} parent=11 // pred_check
        %p188 = pneg %p81
      $region18: #{conv2d_ibnorm_relu.2} parent=11 // pred_check_branch
        %190 = sbr.rel (%p188) target = $region20
      $region19: #{conv2d_ibnorm_relu.2} parent=11 // pred_region
        _
      $region20: #{conv2d_ibnorm_relu.2} parent=11 // pred_fallthru
        _
      // Predicated region
      $region21: #{conv2d_ibnorm_relu.2} parent=11 // pred_check
        %p191 = pneg %p102
      $region22: #{conv2d_ibnorm_relu.2} parent=11 // pred_check_branch
        %193 = sbr.rel (%p191) target = $region24
      $region23: #{conv2d_ibnorm_relu.2} parent=11 // pred_region
        _
      $region24: #{conv2d_ibnorm_relu.2} parent=11 // pred_fallthru
        _
    $region12: #{conv2d_ibnorm_relu.2} parent=5 // pred_fallthru
      _
    %p194 = scmp.lt.s32.totalorder %s13, 2
    // Predicated region
    $region25: #{conv2d_ibnorm_relu.2} parent=5 // pred_check
      %p195 = pneg %p194
    $region26: #{conv2d_ibnorm_relu.2} parent=5 // pred_check_branch
      %197 = sbr.rel (%p195) target = $region28
    $region27: #{conv2d_ibnorm_relu.2} parent=5 // pred_region
      // Predicated region
      $region29: #{conv2d_ibnorm_relu.2} parent=27 // pred_check
        %p198 = pneg %p33
      $region30: #{conv2d_ibnorm_relu.2} parent=27 // pred_check_branch
        %200 = sbr.rel (%p198) target = $region32
      $region31: #{conv2d_ibnorm_relu.2} parent=27 // pred_region
        %p201 = scmp.lt.s32.totalorder %s13, 1
        %s202 = scalar_select %p201, %s13, 1
        %s203 = smul.addr %s202, 4
        %s204 = smul.addr %s203, 4
        %s205 = scalar_lea.vmem %s0, %s204
      $region32: #{conv2d_ibnorm_relu.2} parent=27 // pred_fallthru
        _
    $region28: #{conv2d_ibnorm_relu.2} parent=5 // pred_fallthru
      _
    %p206 = scmp.le.s32.totalorder 1, %s13
    %p207 = scmp.lt.s32.totalorder %s13, 3
    %p208 = pnand %p206, %p207
    %p209 = pneg %p208
    // Predicated region
    $region33: #{conv2d_ibnorm_relu.2} parent=5 // pred_check
      _
    $region34: #{conv2d_ibnorm_relu.2} parent=5 // pred_check_branch
      %211 = sbr.rel (%p208) target = $region36
    $region35: #{conv2d_ibnorm_relu.2} parent=5 // pred_region
      %s212 = ssub.s32 %s13, 1
      %p213 = scmp.lt.s32.totalorder %s18, 1
      %s214 = scalar_select %p213, %s18, 1
      %s215 = smul.addr %s214, 4
      %s216 = smul.addr %s215, 4
      %s217 = scalar_lea.vmem %s0, %s216
      %p218 = pneg %p39
      %p219 = pneg %p36
      %p220 = pneg %p60
      %p221 = pneg %p57
      %p222 = pneg %p81
      %p223 = pneg %p78
      %p224 = pneg %p102
      %p225 = pneg %p99
      %p226 = pneg %p128
      %p227 = pneg %p125
      %p228 = scmp.lt.s32.totalorder %s18, 1
      %s229 = scalar_select %p228, %s18, 1
      %s230 = smul.addr %s229, 3
      %s231 = smul.addr %s230, 8
      %s232 = scalar_lea.vmem %s4, %s231
      %p233 = pneg %p149
      %p234 = pneg %p146
      %p235 = pneg %p170
      %p236 = pneg %p167
      %p237 = scmp.lt.s32.totalorder %s18, 1
      %s238 = scalar_select %p237, %s18, 1
      %s239 = smul.addr %s238, 4
      %s240 = smul.addr %s239, 4
      %s241 = scalar_lea.vmem %s0, %s240
      %p242 = scmp.lt.s32.totalorder %s18, 1
      %s243 = scalar_select %p242, %s18, 1
      %s244 = smul.addr %s243, 3
      %s245 = smul.addr %s244, 8
      %s246 = scalar_lea.vmem %s4, %s245
      %v247 = vld [vmem:[%s241] sm:$0xff]
      %v248 = vld [vmem:[%s241 + $0x8] sm:$0xff]
      %v249 = vld [vmem:[%s1] sm:$0xff]
      %s250 = scalar_lea.vmem %s1, 8
      %v251 = vld [vmem:[%s250] sm:$0xff]
      %v254 = vcombine.high %v247, %v247
      %v255 = vcombine.high %v248, %v248
      %256 = vrot.lane.b32.xlu0 %v247, 127
      %v257 = vpop.permute.xlu0 %256
      %258 = vrot.lane.b32.xlu0 %v254, 127
      %v259 = vpop.permute.xlu0 %258
      %260 = vrot.lane.b32.xlu0 %v248, 127
      %v261 = vpop.permute.xlu0 %260
      %262 = vrot.lane.b32.xlu0 %v255, 127
      %v263 = vpop.permute.xlu0 %262
      %vm264 = vcmask 1039360
      %v265 = vsel %vm264, %v257, %v259
      %v266 = vsel %vm264, %v259, %v261
      %v267 = vsel %vm264, %v261, %v263
      %vm268 = vcmask 31744
      %v270 = vsel %vm268, %v251, 0
      %vm272 = vcmask 1043456
      %v273 = vsel %vm272, %v265, 0
      %v275 = vsel %vm272, %v266, 0
      %v277 = vsel %vm272, %v267, 0
      %279 = vmatprep.subr.mxu0 %v275
      %280 = vmatpush1.msra.mxu0 %v273
      %281 = vmatprep.subr.mxu0 0.0
      %282 = vmatpush1.msra.mxu0 0.0
      %283 = vmatprep.subr.mxu0 0.0
      %284 = vmatpush1.msra.mxu0 0.0
      %285 = vmatprep.subr.mxu0 0.0
      %286 = vmatpush1.msra.mxu0 0.0
      %287 = vmatprep.subr.mxu0 0.0
      %288 = vmatpush1.msra.mxu0 0.0
      %289 = vmatprep.subr.mxu0 0.0
      %290 = vmatpush1.msra.mxu0 0.0
      %291 = vmatprep.subr.mxu0 0.0
      %292 = vmatpush1.msra.mxu0 0.0
      %293 = vmatprep.subr.mxu0 0.0
      %294 = vmatpush1.msra.mxu0 0.0
      %295 = vmatprep.subr.mxu0 0.0
      %296 = vmatpush1.msra.mxu0 0.0
      %297 = vmatprep.subr.mxu0 0.0
      %298 = vmatpush1.msra.mxu0 0.0
      %299 = vmatprep.subr.mxu0 0.0
      %300 = vmatpush1.msra.mxu0 0.0
      %301 = vmatprep.subr.mxu0 0.0
      %302 = vmatpush1.msra.mxu0 0.0
      %303 = vmatprep.subr.mxu0 0.0
      %304 = vmatpush1.msra.mxu0 0.0
      %305 = vmatprep.subr.mxu0 0.0
      %306 = vmatpush1.msra.mxu0 0.0
      %307 = vmatprep.subr.mxu0 0.0
      %308 = vmatpush1.msra.mxu0 0.0
      %309 = vmatprep.subr.mxu0 0.0
      %310 = vmatpush1.msra.mxu0 0.0
      %311 = vmatprep.subr.mxu0 0.0
      %312 = vmatpush1.msra.mxu0 0.0
      %313 = vmatprep.subr.mxu0 0.0
      %314 = vmatpush1.msra.mxu0 0.0
      %315 = vmatprep.subr.mxu0 0.0
      %316 = vmatpush1.msra.mxu0 0.0
      %317 = vmatprep.subr.mxu0 0.0
      %318 = vmatpush1.msra.mxu0 0.0
      %319 = vmatprep.subr.mxu0 0.0
      %320 = vmatpush1.msra.mxu0 0.0
      %321 = vmatprep.subr.mxu0 0.0
      %322 = vmatpush1.msra.mxu0 0.0
      %323 = vmatprep.subr.mxu0 0.0
      %324 = vmatpush1.msra.mxu0 0.0
      %325 = vmatprep.subr.mxu0 0.0
      %326 = vmatpush1.msra.mxu0 0.0
      %327 = vmatprep.subr.mxu0 0.0
      %328 = vmatpush1.msra.mxu0 0.0
      %329 = vmatprep.subr.mxu0 0.0
      %330 = vmatpush1.msra.mxu0 0.0
      %331 = vmatprep.subr.mxu0 0.0
      %332 = vmatpush1.msra.mxu0 0.0
      %333 = vmatprep.subr.mxu0 0.0
      %334 = vmatpush1.msra.mxu0 0.0
      %335 = vmatprep.subr.mxu0 0.0
      %336 = vmatpush1.msra.mxu0 0.0
      %337 = vmatprep.subr.mxu0 0.0
      %338 = vmatpush1.msra.mxu0 0.0
      %339 = vmatprep.subr.mxu0 0.0
      %340 = vmatpush1.msra.mxu0 0.0
      %341 = vmatprep.subr.mxu0 0.0
      %342 = vmatpush1.msra.mxu0 0.0
      %343 = vmatprep.mubr.f32.mxu0 0.0
      %344 = vmatmul.mubr.f32.gmra.mrb[0].mxu0 %v270
      %v345 = vpop.f32.mrb[0].mxu0
      %v346 = vadd.f32 0.0, %v345
      %v347 = vpop.f32.mrb[0].mxu0
      %v348 = vadd.f32 0.0, %v347
      %349 = vdwg.mxu0
      %350 = vmatprep.subr.mxu0 0.0
      %351 = vmatpush1.msra.mxu0 %v277
      %352 = vmatprep.subr.mxu0 0.0
      %353 = vmatpush1.msra.mxu0 0.0
      %354 = vmatprep.subr.mxu0 0.0
      %355 = vmatpush1.msra.mxu0 0.0
      %356 = vmatprep.subr.mxu0 0.0
      %357 = vmatpush1.msra.mxu0 0.0
      %358 = vmatprep.subr.mxu0 0.0
      %359 = vmatpush1.msra.mxu0 0.0
      %360 = vmatprep.subr.mxu0 0.0
      %361 = vmatpush1.msra.mxu0 0.0
      %362 = vmatprep.subr.mxu0 0.0
      %363 = vmatpush1.msra.mxu0 0.0
      %364 = vmatprep.subr.mxu0 0.0
      %365 = vmatpush1.msra.mxu0 0.0
      %366 = vmatprep.subr.mxu0 0.0
      %367 = vmatpush1.msra.mxu0 0.0
      %368 = vmatprep.subr.mxu0 0.0
      %369 = vmatpush1.msra.mxu0 0.0
      %370 = vmatprep.subr.mxu0 0.0
      %371 = vmatpush1.msra.mxu0 0.0
      %372 = vmatprep.subr.mxu0 0.0
      %373 = vmatpush1.msra.mxu0 0.0
      %374 = vmatprep.subr.mxu0 0.0
      %375 = vmatpush1.msra.mxu0 0.0
      %376 = vmatprep.subr.mxu0 0.0
      %377 = vmatpush1.msra.mxu0 0.0
      %378 = vmatprep.subr.mxu0 0.0
      %379 = vmatpush1.msra.mxu0 0.0
      %380 = vmatprep.subr.mxu0 0.0
      %381 = vmatpush1.msra.mxu0 0.0
      %382 = vmatprep.subr.mxu0 0.0
      %383 = vmatpush1.msra.mxu0 0.0
      %384 = vmatprep.subr.mxu0 0.0
      %385 = vmatpush1.msra.mxu0 0.0
      %386 = vmatprep.subr.mxu0 0.0
      %387 = vmatpush1.msra.mxu0 0.0
      %388 = vmatprep.subr.mxu0 0.0
      %389 = vmatpush1.msra.mxu0 0.0
      %390 = vmatprep.subr.mxu0 0.0
      %391 = vmatpush1.msra.mxu0 0.0
      %392 = vmatprep.subr.mxu0 0.0
      %393 = vmatpush1.msra.mxu0 0.0
      %394 = vmatprep.subr.mxu0 0.0
      %395 = vmatpush1.msra.mxu0 0.0
      %396 = vmatprep.subr.mxu0 0.0
      %397 = vmatpush1.msra.mxu0 0.0
      %398 = vmatprep.subr.mxu0 0.0
      %399 = vmatpush1.msra.mxu0 0.0
      %400 = vmatprep.subr.mxu0 0.0
      %401 = vmatpush1.msra.mxu0 0.0
      %402 = vmatprep.subr.mxu0 0.0
      %403 = vmatpush1.msra.mxu0 0.0
      %404 = vmatprep.subr.mxu0 0.0
      %405 = vmatpush1.msra.mxu0 0.0
      %406 = vmatprep.subr.mxu0 0.0
      %407 = vmatpush1.msra.mxu0 0.0
      %408 = vmatprep.subr.mxu0 0.0
      %409 = vmatpush1.msra.mxu0 0.0
      %410 = vmatprep.subr.mxu0 0.0
      %411 = vmatpush1.msra.mxu0 0.0
      %412 = vmatprep.subr.mxu0 0.0
      %413 = vmatpush1.msra.mxu0 0.0
      %414 = vmatprep.mubr.f32.mxu0 0.0
      %415 = vmatmul.mubr.f32.gmra.mrb[0].mxu0 %v270
      %v416 = vpop.f32.mrb[0].mxu0
      %v417 = vadd.f32 0.0, %v416
      %v418 = vpop.f32.mrb[0].mxu0
      %419 = vdwg.mxu0
      %v421 = vsel %vm268, %v249, 0
      %v423 = vsel %vm272, %v247, 0
      %v425 = vsel %vm272, %v254, 0
      %v427 = vsel %vm272, %v248, 0
      %429 = vmatprep.subr.mxu0 %v425
      %430 = vmatpush1.msra.mxu0 %v423
      %431 = vmatprep.subr.mxu0 0.0
      %432 = vmatpush1.msra.mxu0 0.0
      %433 = vmatprep.subr.mxu0 0.0
      %434 = vmatpush1.msra.mxu0 0.0
      %435 = vmatprep.subr.mxu0 0.0
      %436 = vmatpush1.msra.mxu0 0.0
      %437 = vmatprep.subr.mxu0 0.0
      %438 = vmatpush1.msra.mxu0 0.0
      %439 = vmatprep.subr.mxu0 0.0
      %440 = vmatpush1.msra.mxu0 0.0
      %441 = vmatprep.subr.mxu0 0.0
      %442 = vmatpush1.msra.mxu0 0.0
      %443 = vmatprep.subr.mxu0 0.0
      %444 = vmatpush1.msra.mxu0 0.0
      %445 = vmatprep.subr.mxu0 0.0
      %446 = vmatpush1.msra.mxu0 0.0
      %447 = vmatprep.subr.mxu0 0.0
      %448 = vmatpush1.msra.mxu0 0.0
      %449 = vmatprep.subr.mxu0 0.0
      %450 = vmatpush1.msra.mxu0 0.0
      %451 = vmatprep.subr.mxu0 0.0
      %452 = vmatpush1.msra.mxu0 0.0
      %453 = vmatprep.subr.mxu0 0.0
      %454 = vmatpush1.msra.mxu0 0.0
      %455 = vmatprep.subr.mxu0 0.0
      %456 = vmatpush1.msra.mxu0 0.0
      %457 = vmatprep.subr.mxu0 0.0
      %458 = vmatpush1.msra.mxu0 0.0
      %459 = vmatprep.subr.mxu0 0.0
      %460 = vmatpush1.msra.mxu0 0.0
      %461 = vmatprep.subr.mxu0 0.0
      %462 = vmatpush1.msra.mxu0 0.0
      %463 = vmatprep.subr.mxu0 0.0
      %464 = vmatpush1.msra.mxu0 0.0
      %465 = vmatprep.subr.mxu0 0.0
      %466 = vmatpush1.msra.mxu0 0.0
      %467 = vmatprep.subr.mxu0 0.0
      %468 = vmatpush1.msra.mxu0 0.0
      %469 = vmatprep.subr.mxu0 0.0
      %470 = vmatpush1.msra.mxu0 0.0
      %471 = vmatprep.subr.mxu0 0.0
      %472 = vmatpush1.msra.mxu0 0.0
      %473 = vmatprep.subr.mxu0 0.0
      %474 = vmatpush1.msra.mxu0 0.0
      %475 = vmatprep.subr.mxu0 0.0
      %476 = vmatpush1.msra.mxu0 0.0
      %477 = vmatprep.subr.mxu0 0.0
      %478 = vmatpush1.msra.mxu0 0.0
      %479 = vmatprep.subr.mxu0 0.0
      %480 = vmatpush1.msra.mxu0 0.0
      %481 = vmatprep.subr.mxu0 0.0
      %482 = vmatpush1.msra.mxu0 0.0
      %483 = vmatprep.subr.mxu0 0.0
      %484 = vmatpush1.msra.mxu0 0.0
      %485 = vmatprep.subr.mxu0 0.0
      %486 = vmatpush1.msra.mxu0 0.0
      %487 = vmatprep.subr.mxu0 0.0
      %488 = vmatpush1.msra.mxu0 0.0
      %489 = vmatprep.subr.mxu0 0.0
      %490 = vmatpush1.msra.mxu0 0.0
      %491 = vmatprep.subr.mxu0 0.0
      %492 = vmatpush1.msra.mxu0 0.0
      %493 = vmatprep.mubr.f32.mxu0 0.0
      %494 = vmatmul.mubr.f32.gmra.mrb[0].mxu0 %v421
      %v495 = vpop.f32.mrb[0].mxu0
      %v496 = vadd.f32 %v346, %v495
      %v497 = vpop.f32.mrb[0].mxu0
      %v498 = vadd.f32 %v348, %v497
      %499 = vdwg.mxu0
      %500 = vmatprep.subr.mxu0 0.0
      %501 = vmatpush1.msra.mxu0 %v427
      %502 = vmatprep.subr.mxu0 0.0
      %503 = vmatpush1.msra.mxu0 0.0
      %504 = vmatprep.subr.mxu0 0.0
      %505 = vmatpush1.msra.mxu0 0.0
      %506 = vmatprep.subr.mxu0 0.0
      %507 = vmatpush1.msra.mxu0 0.0
      %508 = vmatprep.subr.mxu0 0.0
      %509 = vmatpush1.msra.mxu0 0.0
      %510 = vmatprep.subr.mxu0 0.0
      %511 = vmatpush1.msra.mxu0 0.0
      %512 = vmatprep.subr.mxu0 0.0
      %513 = vmatpush1.msra.mxu0 0.0
      %514 = vmatprep.subr.mxu0 0.0
      %515 = vmatpush1.msra.mxu0 0.0
      %516 = vmatprep.subr.mxu0 0.0
      %517 = vmatpush1.msra.mxu0 0.0
      %518 = vmatprep.subr.mxu0 0.0
      %519 = vmatpush1.msra.mxu0 0.0
      %520 = vmatprep.subr.mxu0 0.0
      %521 = vmatpush1.msra.mxu0 0.0
      %522 = vmatprep.subr.mxu0 0.0
      %523 = vmatpush1.msra.mxu0 0.0
      %524 = vmatprep.subr.mxu0 0.0
      %525 = vmatpush1.msra.mxu0 0.0
      %526 = vmatprep.subr.mxu0 0.0
      %527 = vmatpush1.msra.mxu0 0.0
      %528 = vmatprep.subr.mxu0 0.0
      %529 = vmatpush1.msra.mxu0 0.0
      %530 = vmatprep.subr.mxu0 0.0
      %531 = vmatpush1.msra.mxu0 0.0
      %532 = vmatprep.subr.mxu0 0.0
      %533 = vmatpush1.msra.mxu0 0.0
      %534 = vmatprep.subr.mxu0 0.0
      %535 = vmatpush1.msra.mxu0 0.0
      %536 = vmatprep.subr.mxu0 0.0
      %537 = vmatpush1.msra.mxu0 0.0
      %538 = vmatprep.subr.mxu0 0.0
      %539 = vmatpush1.msra.mxu0 0.0
      %540 = vmatprep.subr.mxu0 0.0
      %541 = vmatpush1.msra.mxu0 0.0
      %542 = vmatprep.subr.mxu0 0.0
      %543 = vmatpush1.msra.mxu0 0.0
      %544 = vmatprep.subr.mxu0 0.0
      %545 = vmatpush1.msra.mxu0 0.0
      %546 = vmatprep.subr.mxu0 0.0
      %547 = vmatpush1.msra.mxu0 0.0
      %548 = vmatprep.subr.mxu0 0.0
      %549 = vmatpush1.msra.mxu0 0.0
      %550 = vmatprep.subr.mxu0 0.0
      %551 = vmatpush1.msra.mxu0 0.0
      %552 = vmatprep.subr.mxu0 0.0
      %553 = vmatpush1.msra.mxu0 0.0
      %554 = vmatprep.subr.mxu0 0.0
      %555 = vmatpush1.msra.mxu0 0.0
      %556 = vmatprep.subr.mxu0 0.0
      %557 = vmatpush1.msra.mxu0 0.0
      %558 = vmatprep.subr.mxu0 0.0
      %559 = vmatpush1.msra.mxu0 0.0
      %560 = vmatprep.subr.mxu0 0.0
      %561 = vmatpush1.msra.mxu0 0.0
      %562 = vmatprep.subr.mxu0 0.0
      %563 = vmatpush1.msra.mxu0 0.0
      %564 = vmatprep.mubr.f32.mxu0 0.0
      %565 = vmatmul.mubr.f32.gmra.mrb[0].mxu0 %v421
      %v566 = vpop.f32.mrb[0].mxu0
      %v567 = vadd.f32 %v417, %v566
      %v568 = vpop.f32.mrb[0].mxu0
      %569 = vdwg.mxu0
      %s570 = scalar_lea.vmem %s1, 16
      %v571 = vld [vmem:[%s570] sm:$0xff]
      %572 = vrot.lane.b32.xlu0 %v247, 126
      %v573 = vpop.permute.xlu0 %572
      %574 = vrot.lane.b32.xlu0 %v254, 126
      %v575 = vpop.permute.xlu0 %574
      %576 = vrot.lane.b32.xlu0 %v248, 126
      %v577 = vpop.permute.xlu0 %576
      %578 = vrot.lane.b32.xlu0 %v255, 126
      %v579 = vpop.permute.xlu0 %578
      %vm580 = vcmask 1031168
      %v581 = vsel %vm580, %v573, %v575
      %v582 = vsel %vm580, %v575, %v577
      %v583 = vsel %vm580, %v577, %v579
      %v585 = vsel %vm268, %v571, 0
      %v587 = vsel %vm272, %v581, 0
      %v589 = vsel %vm272, %v582, 0
      %v591 = vsel %vm272, %v583, 0
      %593 = vmatprep.subr.mxu0 %v589
      %594 = vmatpush1.msra.mxu0 %v587
      %595 = vmatprep.subr.mxu0 0.0
      %596 = vmatpush1.msra.mxu0 0.0
      %597 = vmatprep.subr.mxu0 0.0
      %598 = vmatpush1.msra.mxu0 0.0
      %599 = vmatprep.subr.mxu0 0.0
      %600 = vmatpush1.msra.mxu0 0.0
      %601 = vmatprep.subr.mxu0 0.0
      %602 = vmatpush1.msra.mxu0 0.0
      %603 = vmatprep.subr.mxu0 0.0
      %604 = vmatpush1.msra.mxu0 0.0
      %605 = vmatprep.subr.mxu0 0.0
      %606 = vmatpush1.msra.mxu0 0.0
      %607 = vmatprep.subr.mxu0 0.0
      %608 = vmatpush1.msra.mxu0 0.0
      %609 = vmatprep.subr.mxu0 0.0
      %610 = vmatpush1.msra.mxu0 0.0
      %611 = vmatprep.subr.mxu0 0.0
      %612 = vmatpush1.msra.mxu0 0.0
      %613 = vmatprep.subr.mxu0 0.0
      %614 = vmatpush1.msra.mxu0 0.0
      %615 = vmatprep.subr.mxu0 0.0
      %616 = vmatpush1.msra.mxu0 0.0
      %617 = vmatprep.subr.mxu0 0.0
      %618 = vmatpush1.msra.mxu0 0.0
      %619 = vmatprep.subr.mxu0 0.0
      %620 = vmatpush1.msra.mxu0 0.0
      %621 = vmatprep.subr.mxu0 0.0
      %622 = vmatpush1.msra.mxu0 0.0
      %623 = vmatprep.subr.mxu0 0.0
      %624 = vmatpush1.msra.mxu0 0.0
      %625 = vmatprep.subr.mxu0 0.0
      %626 = vmatpush1.msra.mxu0 0.0
      %627 = vmatprep.subr.mxu0 0.0
      %628 = vmatpush1.msra.mxu0 0.0
      %629 = vmatprep.subr.mxu0 0.0
      %630 = vmatpush1.msra.mxu0 0.0
      %631 = vmatprep.subr.mxu0 0.0
      %632 = vmatpush1.msra.mxu0 0.0
      %633 = vmatprep.subr.mxu0 0.0
      %634 = vmatpush1.msra.mxu0 0.0
      %635 = vmatprep.subr.mxu0 0.0
      %636 = vmatpush1.msra.mxu0 0.0
      %637 = vmatprep.subr.mxu0 0.0
      %638 = vmatpush1.msra.mxu0 0.0
      %639 = vmatprep.subr.mxu0 0.0
      %640 = vmatpush1.msra.mxu0 0.0
      %641 = vmatprep.subr.mxu0 0.0
      %642 = vmatpush1.msra.mxu0 0.0
      %643 = vmatprep.subr.mxu0 0.0
      %644 = vmatpush1.msra.mxu0 0.0
      %645 = vmatprep.subr.mxu0 0.0
      %646 = vmatpush1.msra.mxu0 0.0
      %647 = vmatprep.subr.mxu0 0.0
      %648 = vmatpush1.msra.mxu0 0.0
      %649 = vmatprep.subr.mxu0 0.0
      %650 = vmatpush1.msra.mxu0 0.0
      %651 = vmatprep.subr.mxu0 0.0
      %652 = vmatpush1.msra.mxu0 0.0
      %653 = vmatprep.subr.mxu0 0.0
      %654 = vmatpush1.msra.mxu0 0.0
      %655 = vmatprep.subr.mxu0 0.0
      %656 = vmatpush1.msra.mxu0 0.0
      %657 = vmatprep.mubr.f32.mxu0 0.0
      %658 = vmatmul.mubr.f32.gmra.mrb[0].mxu0 %v585
      %v659 = vpop.f32.mrb[0].mxu0
      %v660 = vadd.f32 0.0, %v659
      %v661 = vpop.f32.mrb[0].mxu0
      %v662 = vadd.f32 0.0, %v661
      %663 = vdwg.mxu0
      %664 = vmatprep.subr.mxu0 0.0
      %665 = vmatpush1.msra.mxu0 %v591
      %666 = vmatprep.subr.mxu0 0.0
      %667 = vmatpush1.msra.mxu0 0.0
      %668 = vmatprep.subr.mxu0 0.0
      %669 = vmatpush1.msra.mxu0 0.0
      %670 = vmatprep.subr.mxu0 0.0
      %671 = vmatpush1.msra.mxu0 0.0
      %672 = vmatprep.subr.mxu0 0.0
      %673 = vmatpush1.msra.mxu0 0.0
      %674 = vmatprep.subr.mxu0 0.0
      %675 = vmatpush1.msra.mxu0 0.0
      %676 = vmatprep.subr.mxu0 0.0
      %677 = vmatpush1.msra.mxu0 0.0
      %678 = vmatprep.subr.mxu0 0.0
      %679 = vmatpush1.msra.mxu0 0.0
      %680 = vmatprep.subr.mxu0 0.0
      %681 = vmatpush1.msra.mxu0 0.0
      %682 = vmatprep.subr.mxu0 0.0
      %683 = vmatpush1.msra.mxu0 0.0
      %684 = vmatprep.subr.mxu0 0.0
      %685 = vmatpush1.msra.mxu0 0.0
      %686 = vmatprep.subr.mxu0 0.0
      %687 = vmatpush1.msra.mxu0 0.0
      %688 = vmatprep.subr.mxu0 0.0
      %689 = vmatpush1.msra.mxu0 0.0
      %690 = vmatprep.subr.mxu0 0.0
      %691 = vmatpush1.msra.mxu0 0.0
      %692 = vmatprep.subr.mxu0 0.0
      %693 = vmatpush1.msra.mxu0 0.0
      %694 = vmatprep.subr.mxu0 0.0
      %695 = vmatpush1.msra.mxu0 0.0
      %696 = vmatprep.subr.mxu0 0.0
      %697 = vmatpush1.msra.mxu0 0.0
      %698 = vmatprep.subr.mxu0 0.0
      %699 = vmatpush1.msra.mxu0 0.0
      %700 = vmatprep.subr.mxu0 0.0
      %701 = vmatpush1.msra.mxu0 0.0
      %702 = vmatprep.subr.mxu0 0.0
      %703 = vmatpush1.msra.mxu0 0.0
      %704 = vmatprep.subr.mxu0 0.0
      %705 = vmatpush1.msra.mxu0 0.0
      %706 = vmatprep.subr.mxu0 0.0
      %707 = vmatpush1.msra.mxu0 0.0
      %708 = vmatprep.subr.mxu0 0.0
      %709 = vmatpush1.msra.mxu0 0.0
      %710 = vmatprep.subr.mxu0 0.0
      %711 = vmatpush1.msra.mxu0 0.0
      %712 = vmatprep.subr.mxu0 0.0
      %713 = vmatpush1.msra.mxu0 0.0
      %714 = vmatprep.subr.mxu0 0.0
      %715 = vmatpush1.msra.mxu0 0.0
      %716 = vmatprep.subr.mxu0 0.0
      %717 = vmatpush1.msra.mxu0 0.0
      %718 = vmatprep.subr.mxu0 0.0
      %719 = vmatpush1.msra.mxu0 0.0
      %720 = vmatprep.subr.mxu0 0.0
      %721 = vmatpush1.msra.mxu0 0.0
      %722 = vmatprep.subr.mxu0 0.0
      %723 = vmatpush1.msra.mxu0 0.0
      %724 = vmatprep.subr.mxu0 0.0
      %725 = vmatpush1.msra.mxu0 0.0
      %726 = vmatprep.subr.mxu0 0.0
      %727 = vmatpush1.msra.mxu0 0.0
      %728 = vmatprep.mubr.f32.mxu0 0.0
      %729 = vmatmul.mubr.f32.gmra.mrb[0].mxu0 %v585
      %v730 = vpop.f32.mrb[0].mxu0
      %v731 = vadd.f32 0.0, %v730
      %v732 = vpop.f32.mrb[0].mxu0
      %733 = vdwg.mxu0
      %v734 = vadd.f32 %v496, %v660
      %v735 = vadd.f32 %v498, %v662
      %v736 = vadd.f32 %v567, %v731
      %s737 = scalar_lea.vmem %s1, 24
      %v738 = vld [vmem:[%s737] sm:$0xff]
      %739 = vrot.lane.b32.xlu0 %v247, 110
      %v740 = vpop.permute.xlu0 %739
      %741 = vrot.lane.b32.xlu0 %v254, 110
      %v742 = vpop.permute.xlu0 %741
      %743 = vrot.lane.b32.xlu0 %v248, 110
      %v744 = vpop.permute.xlu0 %743
      %745 = vrot.lane.b32.xlu0 %v255, 110
      %v746 = vpop.permute.xlu0 %745
      %vm747 = vcmask 900096
      %v748 = vsel %vm747, %v740, %v742
      %v749 = vsel %vm747, %v742, %v744
      %v750 = vsel %vm747, %v744, %v746
      %v752 = vsel %vm268, %v738, 0
      %v754 = vsel %vm272, %v748, 0
      %v756 = vsel %vm272, %v749, 0
      %v758 = vsel %vm272, %v750, 0
      %760 = vmatprep.subr.mxu0 %v756
      %761 = vmatpush1.msra.mxu0 %v754
      %762 = vmatprep.subr.mxu0 0.0
      %763 = vmatpush1.msra.mxu0 0.0
      %764 = vmatprep.subr.mxu0 0.0
      %765 = vmatpush1.msra.mxu0 0.0
      %766 = vmatprep.subr.mxu0 0.0
      %767 = vmatpush1.msra.mxu0 0.0
      %768 = vmatprep.subr.mxu0 0.0
      %769 = vmatpush1.msra.mxu0 0.0
      %770 = vmatprep.subr.mxu0 0.0
      %771 = vmatpush1.msra.mxu0 0.0
      %772 = vmatprep.subr.mxu0 0.0
      %773 = vmatpush1.msra.mxu0 0.0
      %774 = vmatprep.subr.mxu0 0.0
      %775 = vmatpush1.msra.mxu0 0.0
      %776 = vmatprep.subr.mxu0 0.0
      %777 = vmatpush1.msra.mxu0 0.0
      %778 = vmatprep.subr.mxu0 0.0
      %779 = vmatpush1.msra.mxu0 0.0
      %780 = vmatprep.subr.mxu0 0.0
      %781 = vmatpush1.msra.mxu0 0.0
      %782 = vmatprep.subr.mxu0 0.0
      %783 = vmatpush1.msra.mxu0 0.0
      %784 = vmatprep.subr.mxu0 0.0
      %785 = vmatpush1.msra.mxu0 0.0
      %786 = vmatprep.subr.mxu0 0.0
      %787 = vmatpush1.msra.mxu0 0.0
      %788 = vmatprep.subr.mxu0 0.0
      %789 = vmatpush1.msra.mxu0 0.0
      %790 = vmatprep.subr.mxu0 0.0
      %791 = vmatpush1.msra.mxu0 0.0
      %792 = vmatprep.subr.mxu0 0.0
      %793 = vmatpush1.msra.mxu0 0.0
      %794 = vmatprep.subr.mxu0 0.0
      %795 = vmatpush1.msra.mxu0 0.0
      %796 = vmatprep.subr.mxu0 0.0
      %797 = vmatpush1.msra.mxu0 0.0
      %798 = vmatprep.subr.mxu0 0.0
      %799 = vmatpush1.msra.mxu0 0.0
      %800 = vmatprep.subr.mxu0 0.0
      %801 = vmatpush1.msra.mxu0 0.0
      %802 = vmatprep.subr.mxu0 0.0
      %803 = vmatpush1.msra.mxu0 0.0
      %804 = vmatprep.subr.mxu0 0.0
      %805 = vmatpush1.msra.mxu0 0.0
      %806 = vmatprep.subr.mxu0 0.0
      %807 = vmatpush1.msra.mxu0 0.0
      %808 = vmatprep.subr.mxu0 0.0
      %809 = vmatpush1.msra.mxu0 0.0
      %810 = vmatprep.subr.mxu0 0.0
      %811 = vmatpush1.msra.mxu0 0.0
      %812 = vmatprep.subr.mxu0 0.0
      %813 = vmatpush1.msra.mxu0 0.0
      %814 = vmatprep.subr.mxu0 0.0
      %815 = vmatpush1.msra.mxu0 0.0
      %816 = vmatprep.subr.mxu0 0.0
      %817 = vmatpush1.msra.mxu0 0.0
      %818 = vmatprep.subr.mxu0 0.0
      %819 = vmatpush1.msra.mxu0 0.0
      %820 = vmatprep.subr.mxu0 0.0
      %821 = vmatpush1.msra.mxu0 0.0
      %822 = vmatprep.subr.mxu0 0.0
      %823 = vmatpush1.msra.mxu0 0.0
      %824 = vmatprep.mubr.f32.mxu0 0.0
      %825 = vmatmul.mubr.f32.gmra.mrb[0].mxu0 %v752
      %v826 = vpop.f32.mrb[0].mxu0
      %v827 = vadd.f32 0.0, %v826
      %v828 = vpop.f32.mrb[0].mxu0
      %v829 = vadd.f32 0.0, %v828
      %830 = vdwg.mxu0
      %831 = vmatprep.subr.mxu0 0.0
      %832 = vmatpush1.msra.mxu0 %v758
      %833 = vmatprep.subr.mxu0 0.0
      %834 = vmatpush1.msra.mxu0 0.0
      %835 = vmatprep.subr.mxu0 0.0
      %836 = vmatpush1.msra.mxu0 0.0
      %837 = vmatprep.subr.mxu0 0.0
      %838 = vmatpush1.msra.mxu0 0.0
      %839 = vmatprep.subr.mxu0 0.0
      %840 = vmatpush1.msra.mxu0 0.0
      %841 = vmatprep.subr.mxu0 0.0
      %842 = vmatpush1.msra.mxu0 0.0
      %843 = vmatprep.subr.mxu0 0.0
      %844 = vmatpush1.msra.mxu0 0.0
      %845 = vmatprep.subr.mxu0 0.0
      %846 = vmatpush1.msra.mxu0 0.0
      %847 = vmatprep.subr.mxu0 0.0
      %848 = vmatpush1.msra.mxu0 0.0
      %849 = vmatprep.subr.mxu0 0.0
      %850 = vmatpush1.msra.mxu0 0.0
      %851 = vmatprep.subr.mxu0 0.0
      %852 = vmatpush1.msra.mxu0 0.0
      %853 = vmatprep.subr.mxu0 0.0
      %854 = vmatpush1.msra.mxu0 0.0
      %855 = vmatprep.subr.mxu0 0.0
      %856 = vmatpush1.msra.mxu0 0.0
      %857 = vmatprep.subr.mxu0 0.0
      %858 = vmatpush1.msra.mxu0 0.0
      %859 = vmatprep.subr.mxu0 0.0
      %860 = vmatpush1.msra.mxu0 0.0
      %861 = vmatprep.subr.mxu0 0.0
      %862 = vmatpush1.msra.mxu0 0.0
      %863 = vmatprep.subr.mxu0 0.0
      %864 = vmatpush1.msra.mxu0 0.0
      %865 = vmatprep.subr.mxu0 0.0
      %866 = vmatpush1.msra.mxu0 0.0
      %867 = vmatprep.subr.mxu0 0.0
      %868 = vmatpush1.msra.mxu0 0.0
      %869 = vmatprep.subr.mxu0 0.0
      %870 = vmatpush1.msra.mxu0 0.0
      %871 = vmatprep.subr.mxu0 0.0
      %872 = vmatpush1.msra.mxu0 0.0
      %873 = vmatprep.subr.mxu0 0.0
      %874 = vmatpush1.msra.mxu0 0.0
      %875 = vmatprep.subr.mxu0 0.0
      %876 = vmatpush1.msra.mxu0 0.0
      %877 = vmatprep.subr.mxu0 0.0
      %878 = vmatpush1.msra.mxu0 0.0
      %879 = vmatprep.subr.mxu0 0.0
      %880 = vmatpush1.msra.mxu0 0.0
      %881 = vmatprep.subr.mxu0 0.0
      %882 = vmatpush1.msra.mxu0 0.0
      %883 = vmatprep.subr.mxu0 0.0
      %884 = vmatpush1.msra.mxu0 0.0
      %885 = vmatprep.subr.mxu0 0.0
      %886 = vmatpush1.msra.mxu0 0.0
      %887 = vmatprep.subr.mxu0 0.0
      %888 = vmatpush1.msra.mxu0 0.0
      %889 = vmatprep.subr.mxu0 0.0
      %890 = vmatpush1.msra.mxu0 0.0
      %891 = vmatprep.subr.mxu0 0.0
      %892 = vmatpush1.msra.mxu0 0.0
      %893 = vmatprep.subr.mxu0 0.0
      %894 = vmatpush1.msra.mxu0 0.0
      %895 = vmatprep.mubr.f32.mxu0 0.0
      %896 = vmatmul.mubr.f32.gmra.mrb[0].mxu0 %v752
      %v897 = vpop.f32.mrb[0].mxu0
      %v898 = vadd.f32 0.0, %v897
      %v899 = vpop.f32.mrb[0].mxu0
      %900 = vdwg.mxu0
      %v901 = vadd.f32 %v734, %v827
      %v902 = vadd.f32 %v735, %v829
      %v903 = vadd.f32 %v736, %v898
      %s904 = scalar_lea.vmem %s1, 32
      %v905 = vld [vmem:[%s904] sm:$0xff]
      %906 = vrot.lane.b32.xlu0 %v247, 109
      %v907 = vpop.permute.xlu0 %906
      %908 = vrot.lane.b32.xlu0 %v254, 109
      %v909 = vpop.permute.xlu0 %908
      %910 = vrot.lane.b32.xlu0 %v248, 109
      %v911 = vpop.permute.xlu0 %910
      %912 = vrot.lane.b32.xlu0 %v255, 109
      %v913 = vpop.permute.xlu0 %912
      %vm914 = vcmask 891904
      %v915 = vsel %vm914, %v907, %v909
      %v916 = vsel %vm914, %v909, %v911
      %v917 = vsel %vm914, %v911, %v913
      %v919 = vsel %vm268, %v905, 0
      %v921 = vsel %vm272, %v915, 0
      %v923 = vsel %vm272, %v916, 0
      %v925 = vsel %vm272, %v917, 0
      %927 = vmatprep.subr.mxu0 %v923
      %928 = vmatpush1.msra.mxu0 %v921
      %929 = vmatprep.subr.mxu0 0.0
      %930 = vmatpush1.msra.mxu0 0.0
      %931 = vmatprep.subr.mxu0 0.0
      %932 = vmatpush1.msra.mxu0 0.0
      %933 = vmatprep.subr.mxu0 0.0
      %934 = vmatpush1.msra.mxu0 0.0
      %935 = vmatprep.subr.mxu0 0.0
      %936 = vmatpush1.msra.mxu0 0.0
      %937 = vmatprep.subr.mxu0 0.0
      %938 = vmatpush1.msra.mxu0 0.0
      %939 = vmatprep.subr.mxu0 0.0
      %940 = vmatpush1.msra.mxu0 0.0
      %941 = vmatprep.subr.mxu0 0.0
      %942 = vmatpush1.msra.mxu0 0.0
      %943 = vmatprep.subr.mxu0 0.0
      %944 = vmatpush1.msra.mxu0 0.0
      %945 = vmatprep.subr.mxu0 0.0
      %946 = vmatpush1.msra.mxu0 0.0
      %947 = vmatprep.subr.mxu0 0.0
      %948 = vmatpush1.msra.mxu0 0.0
      %949 = vmatprep.subr.mxu0 0.0
      %950 = vmatpush1.msra.mxu0 0.0
      %951 = vmatprep.subr.mxu0 0.0
      %952 = vmatpush1.msra.mxu0 0.0
      %953 = vmatprep.subr.mxu0 0.0
      %954 = vmatpush1.msra.mxu0 0.0
      %955 = vmatprep.subr.mxu0 0.0
      %956 = vmatpush1.msra.mxu0 0.0
      %957 = vmatprep.subr.mxu0 0.0
      %958 = vmatpush1.msra.mxu0 0.0
      %959 = vmatprep.subr.mxu0 0.0
      %960 = vmatpush1.msra.mxu0 0.0
      %961 = vmatprep.subr.mxu0 0.0
      %962 = vmatpush1.msra.mxu0 0.0
      %963 = vmatprep.subr.mxu0 0.0
      %964 = vmatpush1.msra.mxu0 0.0
      %965 = vmatprep.subr.mxu0 0.0
      %966 = vmatpush1.msra.mxu0 0.0
      %967 = vmatprep.subr.mxu0 0.0
      %968 = vmatpush1.msra.mxu0 0.0
      %969 = vmatprep.subr.mxu0 0.0
      %970 = vmatpush1.msra.mxu0 0.0
      %971 = vmatprep.subr.mxu0 0.0
      %972 = vmatpush1.msra.mxu0 0.0
      %973 = vmatprep.subr.mxu0 0.0
      %974 = vmatpush1.msra.mxu0 0.0
      %975 = vmatprep.subr.mxu0 0.0
      %976 = vmatpush1.msra.mxu0 0.0
      %977 = vmatprep.subr.mxu0 0.0
      %978 = vmatpush1.msra.mxu0 0.0
      %979 = vmatprep.subr.mxu0 0.0
      %980 = vmatpush1.msra.mxu0 0.0
      %981 = vmatprep.subr.mxu0 0.0
      %982 = vmatpush1.msra.mxu0 0.0
      %983 = vmatprep.subr.mxu0 0.0
      %984 = vmatpush1.msra.mxu0 0.0
      %985 = vmatprep.subr.mxu0 0.0
      %986 = vmatpush1.msra.mxu0 0.0
      %987 = vmatprep.subr.mxu0 0.0
      %988 = vmatpush1.msra.mxu0 0.0
      %989 = vmatprep.subr.mxu0 0.0
      %990 = vmatpush1.msra.mxu0 0.0
      %991 = vmatprep.mubr.f32.mxu0 0.0
      %992 = vmatmul.mubr.f32.gmra.mrb[0].mxu0 %v919
      %v993 = vpop.f32.mrb[0].mxu0
      %v994 = vadd.f32 0.0, %v993
      %v995 = vpop.f32.mrb[0].mxu0
      %v996 = vadd.f32 0.0, %v995
      %997 = vdwg.mxu0
      %998 = vmatprep.subr.mxu0 0.0
      %999 = vmatpush1.msra.mxu0 %v925
      %1000 = vmatprep.subr.mxu0 0.0
      %1001 = vmatpush1.msra.mxu0 0.0
      %1002 = vmatprep.subr.mxu0 0.0
      %1003 = vmatpush1.msra.mxu0 0.0
      %1004 = vmatprep.subr.mxu0 0.0
      %1005 = vmatpush1.msra.mxu0 0.0
      %1006 = vmatprep.subr.mxu0 0.0
      %1007 = vmatpush1.msra.mxu0 0.0
      %1008 = vmatprep.subr.mxu0 0.0
      %1009 = vmatpush1.msra.mxu0 0.0
      %1010 = vmatprep.subr.mxu0 0.0
      %1011 = vmatpush1.msra.mxu0 0.0
      %1012 = vmatprep.subr.mxu0 0.0
      %1013 = vmatpush1.msra.mxu0 0.0
      %1014 = vmatprep.subr.mxu0 0.0
      %1015 = vmatpush1.msra.mxu0 0.0
      %1016 = vmatprep.subr.mxu0 0.0
      %1017 = vmatpush1.msra.mxu0 0.0
      %1018 = vmatprep.subr.mxu0 0.0
      %1019 = vmatpush1.msra.mxu0 0.0
      %1020 = vmatprep.subr.mxu0 0.0
      %1021 = vmatpush1.msra.mxu0 0.0
      %1022 = vmatprep.subr.mxu0 0.0
      %1023 = vmatpush1.msra.mxu0 0.0
      %1024 = vmatprep.subr.mxu0 0.0
      %1025 = vmatpush1.msra.mxu0 0.0
      %1026 = vmatprep.subr.mxu0 0.0
      %1027 = vmatpush1.msra.mxu0 0.0
      %1028 = vmatprep.subr.mxu0 0.0
      %1029 = vmatpush1.msra.mxu0 0.0
      %1030 = vmatprep.subr.mxu0 0.0
      %1031 = vmatpush1.msra.mxu0 0.0
      %1032 = vmatprep.subr.mxu0 0.0
      %1033 = vmatpush1.msra.mxu0 0.0
      %1034 = vmatprep.subr.mxu0 0.0
      %1035 = vmatpush1.msra.mxu0 0.0
      %1036 = vmatprep.subr.mxu0 0.0
      %1037 = vmatpush1.msra.mxu0 0.0
      %1038 = vmatprep.subr.mxu0 0.0
      %1039 = vmatpush1.msra.mxu0 0.0
      %1040 = vmatprep.subr.mxu0 0.0
      %1041 = vmatpush1.msra.mxu0 0.0
      %1042 = vmatprep.subr.mxu0 0.0
      %1043 = vmatpush1.msra.mxu0 0.0
      %1044 = vmatprep.subr.mxu0 0.0
      %1045 = vmatpush1.msra.mxu0 0.0
      %1046 = vmatprep.subr.mxu0 0.0
      %1047 = vmatpush1.msra.mxu0 0.0
      %1048 = vmatprep.subr.mxu0 0.0
      %1049 = vmatpush1.msra.mxu0 0.0
      %1050 = vmatprep.subr.mxu0 0.0
      %1051 = vmatpush1.msra.mxu0 0.0
      %1052 = vmatprep.subr.mxu0 0.0
      %1053 = vmatpush1.msra.mxu0 0.0
      %1054 = vmatprep.subr.mxu0 0.0
      %1055 = vmatpush1.msra.mxu0 0.0
      %1056 = vmatprep.subr.mxu0 0.0
      %1057 = vmatpush1.msra.mxu0 0.0
      %1058 = vmatprep.subr.mxu0 0.0
      %1059 = vmatpush1.msra.mxu0 0.0
      %1060 = vmatprep.subr.mxu0 0.0
      %1061 = vmatpush1.msra.mxu0 0.0
      %1062 = vmatprep.mubr.f32.mxu0 0.0
      %1063 = vmatmul.mubr.f32.gmra.mrb[0].mxu0 %v919
      %v1064 = vpop.f32.mrb[0].mxu0
      %v1065 = vadd.f32 0.0, %v1064
      %v1066 = vpop.f32.mrb[0].mxu0
      %1067 = vdwg.mxu0
      %v1068 = vadd.f32 %v901, %v994
      %v1069 = vadd.f32 %v902, %v996
      %v1070 = vadd.f32 %v903, %v1065
      %s1071 = scalar_lea.vmem %s1, 40
      %v1072 = vld [vmem:[%s1071] sm:$0xff]
      %1073 = vrot.lane.b32.xlu0 %v247, 108
      %v1074 = vpop.permute.xlu0 %1073
      %1075 = vrot.lane.b32.xlu0 %v254, 108
      %v1076 = vpop.permute.xlu0 %1075
      %1077 = vrot.lane.b32.xlu0 %v248, 108
      %v1078 = vpop.permute.xlu0 %1077
      %1079 = vrot.lane.b32.xlu0 %v255, 108
      %v1080 = vpop.permute.xlu0 %1079
      %vm1081 = vcmask 883712
      %v1082 = vsel %vm1081, %v1074, %v1076
      %v1083 = vsel %vm1081, %v1076, %v1078
      %v1084 = vsel %vm1081, %v1078, %v1080
      %v1086 = vsel %vm268, %v1072, 0
      %v1088 = vsel %vm272, %v1082, 0
      %v1090 = vsel %vm272, %v1083, 0
      %v1092 = vsel %vm272, %v1084, 0
      %1094 = vmatprep.subr.mxu0 %v1090
      %1095 = vmatpush1.msra.mxu0 %v1088
      %1096 = vmatprep.subr.mxu0 0.0
      %1097 = vmatpush1.msra.mxu0 0.0
      %1098 = vmatprep.subr.mxu0 0.0
      %1099 = vmatpush1.msra.mxu0 0.0
      %1100 = vmatprep.subr.mxu0 0.0
      %1101 = vmatpush1.msra.mxu0 0.0
      %1102 = vmatprep.subr.mxu0 0.0
      %1103 = vmatpush1.msra.mxu0 0.0
      %1104 = vmatprep.subr.mxu0 0.0
      %1105 = vmatpush1.msra.mxu0 0.0
      %1106 = vmatprep.subr.mxu0 0.0
      %1107 = vmatpush1.msra.mxu0 0.0
      %1108 = vmatprep.subr.mxu0 0.0
      %1109 = vmatpush1.msra.mxu0 0.0
      %1110 = vmatprep.subr.mxu0 0.0
      %1111 = vmatpush1.msra.mxu0 0.0
      %1112 = vmatprep.subr.mxu0 0.0
      %1113 = vmatpush1.msra.mxu0 0.0
      %1114 = vmatprep.subr.mxu0 0.0
      %1115 = vmatpush1.msra.mxu0 0.0
      %1116 = vmatprep.subr.mxu0 0.0
      %1117 = vmatpush1.msra.mxu0 0.0
      %1118 = vmatprep.subr.mxu0 0.0
      %1119 = vmatpush1.msra.mxu0 0.0
      %1120 = vmatprep.subr.mxu0 0.0
      %1121 = vmatpush1.msra.mxu0 0.0
      %1122 = vmatprep.subr.mxu0 0.0
      %1123 = vmatpush1.msra.mxu0 0.0
      %1124 = vmatprep.subr.mxu0 0.0
      %1125 = vmatpush1.msra.mxu0 0.0
      %1126 = vmatprep.subr.mxu0 0.0
      %1127 = vmatpush1.msra.mxu0 0.0
      %1128 = vmatprep.subr.mxu0 0.0
      %1129 = vmatpush1.msra.mxu0 0.0
      %1130 = vmatprep.subr.mxu0 0.0
      %1131 = vmatpush1.msra.mxu0 0.0
      %1132 = vmatprep.subr.mxu0 0.0
      %1133 = vmatpush1.msra.mxu0 0.0
      %1134 = vmatprep.subr.mxu0 0.0
      %1135 = vmatpush1.msra.mxu0 0.0
      %1136 = vmatprep.subr.mxu0 0.0
      %1137 = vmatpush1.msra.mxu0 0.0
      %1138 = vmatprep.subr.mxu0 0.0
      %1139 = vmatpush1.msra.mxu0 0.0
      %1140 = vmatprep.subr.mxu0 0.0
      %1141 = vmatpush1.msra.mxu0 0.0
      %1142 = vmatprep.subr.mxu0 0.0
      %1143 = vmatpush1.msra.mxu0 0.0
      %1144 = vmatprep.subr.mxu0 0.0
      %1145 = vmatpush1.msra.mxu0 0.0
      %1146 = vmatprep.subr.mxu0 0.0
      %1147 = vmatpush1.msra.mxu0 0.0
      %1148 = vmatprep.subr.mxu0 0.0
      %1149 = vmatpush1.msra.mxu0 0.0
      %1150 = vmatprep.subr.mxu0 0.0
      %1151 = vmatpush1.msra.mxu0 0.0
      %1152 = vmatprep.subr.mxu0 0.0
      %1153 = vmatpush1.msra.mxu0 0.0
      %1154 = vmatprep.subr.mxu0 0.0
      %1155 = vmatpush1.msra.mxu0 0.0
      %1156 = vmatprep.subr.mxu0 0.0
      %1157 = vmatpush1.msra.mxu0 0.0
      %1158 = vmatprep.mubr.f32.mxu0 0.0
      %1159 = vmatmul.mubr.f32.gmra.mrb[0].mxu0 %v1086
      %v1160 = vpop.f32.mrb[0].mxu0
      %v1161 = vadd.f32 0.0, %v1160
      %v1162 = vpop.f32.mrb[0].mxu0
      %v1163 = vadd.f32 0.0, %v1162
      %1164 = vdwg.mxu0
      %1165 = vmatprep.subr.mxu0 0.0
      %1166 = vmatpush1.msra.mxu0 %v1092
      %1167 = vmatprep.subr.mxu0 0.0
      %1168 = vmatpush1.msra.mxu0 0.0
      %1169 = vmatprep.subr.mxu0 0.0
      %1170 = vmatpush1.msra.mxu0 0.0
      %1171 = vmatprep.subr.mxu0 0.0
      %1172 = vmatpush1.msra.mxu0 0.0
      %1173 = vmatprep.subr.mxu0 0.0
      %1174 = vmatpush1.msra.mxu0 0.0
      %1175 = vmatprep.subr.mxu0 0.0
      %1176 = vmatpush1.msra.mxu0 0.0
      %1177 = vmatprep.subr.mxu0 0.0
      %1178 = vmatpush1.msra.mxu0 0.0
      %1179 = vmatprep.subr.mxu0 0.0
      %1180 = vmatpush1.msra.mxu0 0.0
      %1181 = vmatprep.subr.mxu0 0.0
      %1182 = vmatpush1.msra.mxu0 0.0
      %1183 = vmatprep.subr.mxu0 0.0
      %1184 = vmatpush1.msra.mxu0 0.0
      %1185 = vmatprep.subr.mxu0 0.0
      %1186 = vmatpush1.msra.mxu0 0.0
      %1187 = vmatprep.subr.mxu0 0.0
      %1188 = vmatpush1.msra.mxu0 0.0
      %1189 = vmatprep.subr.mxu0 0.0
      %1190 = vmatpush1.msra.mxu0 0.0
      %1191 = vmatprep.subr.mxu0 0.0
      %1192 = vmatpush1.msra.mxu0 0.0
      %1193 = vmatprep.subr.mxu0 0.0
      %1194 = vmatpush1.msra.mxu0 0.0
      %1195 = vmatprep.subr.mxu0 0.0
      %1196 = vmatpush1.msra.mxu0 0.0
      %1197 = vmatprep.subr.mxu0 0.0
      %1198 = vmatpush1.msra.mxu0 0.0
      %1199 = vmatprep.subr.mxu0 0.0
      %1200 = vmatpush1.msra.mxu0 0.0
      %1201 = vmatprep.subr.mxu0 0.0
      %1202 = vmatpush1.msra.mxu0 0.0
      %1203 = vmatprep.subr.mxu0 0.0
      %1204 = vmatpush1.msra.mxu0 0.0
      %1205 = vmatprep.subr.mxu0 0.0
      %1206 = vmatpush1.msra.mxu0 0.0
      %1207 = vmatprep.subr.mxu0 0.0
      %1208 = vmatpush1.msra.mxu0 0.0
      %1209 = vmatprep.subr.mxu0 0.0
      %1210 = vmatpush1.msra.mxu0 0.0
      %1211 = vmatprep.subr.mxu0 0.0
      %1212 = vmatpush1.msra.mxu0 0.0
      %1213 = vmatprep.subr.mxu0 0.0
      %1214 = vmatpush1.msra.mxu0 0.0
      %1215 = vmatprep.subr.mxu0 0.0
      %1216 = vmatpush1.msra.mxu0 0.0
      %1217 = vmatprep.subr.mxu0 0.0
      %1218 = vmatpush1.msra.mxu0 0.0
      %1219 = vmatprep.subr.mxu0 0.0
      %1220 = vmatpush1.msra.mxu0 0.0
      %1221 = vmatprep.subr.mxu0 0.0
      %1222 = vmatpush1.msra.mxu0 0.0
      %1223 = vmatprep.subr.mxu0 0.0
      %1224 = vmatpush1.msra.mxu0 0.0
      %1225 = vmatprep.subr.mxu0 0.0
      %1226 = vmatpush1.msra.mxu0 0.0
      %1227 = vmatprep.subr.mxu0 0.0
      %1228 = vmatpush1.msra.mxu0 0.0
      %1229 = vmatprep.mubr.f32.mxu0 0.0
      %1230 = vmatmul.mubr.f32.gmra.mrb[0].mxu0 %v1086
      %v1231 = vpop.f32.mrb[0].mxu0
      %v1232 = vadd.f32 0.0, %v1231
      %v1233 = vpop.f32.mrb[0].mxu0
      %1234 = vdwg.mxu0
      %v1235 = vadd.f32 %v1068, %v1161
      %v1236 = vadd.f32 %v1069, %v1163
      %v1237 = vadd.f32 %v1070, %v1232
      %s1238 = scalar_lea.vmem %s1, 48
      %v1239 = vld [vmem:[%s1238] sm:$0xff]
      %1240 = vrot.lane.b32.xlu0 %v247, 92
      %v1241 = vpop.permute.xlu0 %1240
      %1242 = vrot.lane.b32.xlu0 %v254, 92
      %v1243 = vpop.permute.xlu0 %1242
      %1244 = vrot.lane.b32.xlu0 %v248, 92
      %v1245 = vpop.permute.xlu0 %1244
      %1246 = vrot.lane.b32.xlu0 %v255, 92
      %v1247 = vpop.permute.xlu0 %1246
      %vm1248 = vcmask 752640
      %v1249 = vsel %vm1248, %v1241, %v1243
      %v1250 = vsel %vm1248, %v1243, %v1245
      %v1251 = vsel %vm1248, %v1245, %v1247
      %v1253 = vsel %vm268, %v1239, 0
      %v1255 = vsel %vm272, %v1249, 0
      %v1257 = vsel %vm272, %v1250, 0
      %v1259 = vsel %vm272, %v1251, 0
      %1261 = vmatprep.subr.mxu0 %v1257
      %1262 = vmatpush1.msra.mxu0 %v1255
      %1263 = vmatprep.subr.mxu0 0.0
      %1264 = vmatpush1.msra.mxu0 0.0
      %1265 = vmatprep.subr.mxu0 0.0
      %1266 = vmatpush1.msra.mxu0 0.0
      %1267 = vmatprep.subr.mxu0 0.0
      %1268 = vmatpush1.msra.mxu0 0.0
      %1269 = vmatprep.subr.mxu0 0.0
      %1270 = vmatpush1.msra.mxu0 0.0
      %1271 = vmatprep.subr.mxu0 0.0
      %1272 = vmatpush1.msra.mxu0 0.0
      %1273 = vmatprep.subr.mxu0 0.0
      %1274 = vmatpush1.msra.mxu0 0.0
      %1275 = vmatprep.subr.mxu0 0.0
      %1276 = vmatpush1.msra.mxu0 0.0
      %1277 = vmatprep.subr.mxu0 0.0
      %1278 = vmatpush1.msra.mxu0 0.0
      %1279 = vmatprep.subr.mxu0 0.0
      %1280 = vmatpush1.msra.mxu0 0.0
      %1281 = vmatprep.subr.mxu0 0.0
      %1282 = vmatpush1.msra.mxu0 0.0
      %1283 = vmatprep.subr.mxu0 0.0
      %1284 = vmatpush1.msra.mxu0 0.0
      %1285 = vmatprep.subr.mxu0 0.0
      %1286 = vmatpush1.msra.mxu0 0.0
      %1287 = vmatprep.subr.mxu0 0.0
      %1288 = vmatpush1.msra.mxu0 0.0
      %1289 = vmatprep.subr.mxu0 0.0
      %1290 = vmatpush1.msra.mxu0 0.0
      %1291 = vmatprep.subr.mxu0 0.0
      %1292 = vmatpush1.msra.mxu0 0.0
      %1293 = vmatprep.subr.mxu0 0.0
      %1294 = vmatpush1.msra.mxu0 0.0
      %1295 = vmatprep.subr.mxu0 0.0
      %1296 = vmatpush1.msra.mxu0 0.0
      %1297 = vmatprep.subr.mxu0 0.0
      %1298 = vmatpush1.msra.mxu0 0.0
      %1299 = vmatprep.subr.mxu0 0.0
      %1300 = vmatpush1.msra.mxu0 0.0
      %1301 = vmatprep.subr.mxu0 0.0
      %1302 = vmatpush1.msra.mxu0 0.0
      %1303 = vmatprep.subr.mxu0 0.0
      %1304 = vmatpush1.msra.mxu0 0.0
      %1305 = vmatprep.subr.mxu0 0.0
      %1306 = vmatpush1.msra.mxu0 0.0
      %1307 = vmatprep.subr.mxu0 0.0
      %1308 = vmatpush1.msra.mxu0 0.0
      %1309 = vmatprep.subr.mxu0 0.0
      %1310 = vmatpush1.msra.mxu0 0.0
      %1311 = vmatprep.subr.mxu0 0.0
      %1312 = vmatpush1.msra.mxu0 0.0
      %1313 = vmatprep.subr.mxu0 0.0
      %1314 = vmatpush1.msra.mxu0 0.0
      %1315 = vmatprep.subr.mxu0 0.0
      %1316 = vmatpush1.msra.mxu0 0.0
      %1317 = vmatprep.subr.mxu0 0.0
      %1318 = vmatpush1.msra.mxu0 0.0
      %1319 = vmatprep.subr.mxu0 0.0
      %1320 = vmatpush1.msra.mxu0 0.0
      %1321 = vmatprep.subr.mxu0 0.0
      %1322 = vmatpush1.msra.mxu0 0.0
      %1323 = vmatprep.subr.mxu0 0.0
      %1324 = vmatpush1.msra.mxu0 0.0
      %1325 = vmatprep.mubr.f32.mxu0 0.0
      %1326 = vmatmul.mubr.f32.gmra.mrb[0].mxu0 %v1253
      %v1327 = vpop.f32.mrb[0].mxu0
      %v1328 = vadd.f32 0.0, %v1327
      %v1329 = vpop.f32.mrb[0].mxu0
      %v1330 = vadd.f32 0.0, %v1329
      %1331 = vdwg.mxu0
      %1332 = vmatprep.subr.mxu0 0.0
      %1333 = vmatpush1.msra.mxu0 %v1259
      %1334 = vmatprep.subr.mxu0 0.0
      %1335 = vmatpush1.msra.mxu0 0.0
      %1336 = vmatprep.subr.mxu0 0.0
      %1337 = vmatpush1.msra.mxu0 0.0
      %1338 = vmatprep.subr.mxu0 0.0
      %1339 = vmatpush1.msra.mxu0 0.0
      %1340 = vmatprep.subr.mxu0 0.0
      %1341 = vmatpush1.msra.mxu0 0.0
      %1342 = vmatprep.subr.mxu0 0.0
      %1343 = vmatpush1.msra.mxu0 0.0
      %1344 = vmatprep.subr.mxu0 0.0
      %1345 = vmatpush1.msra.mxu0 0.0
      %1346 = vmatprep.subr.mxu0 0.0
      %1347 = vmatpush1.msra.mxu0 0.0
      %1348 = vmatprep.subr.mxu0 0.0
      %1349 = vmatpush1.msra.mxu0 0.0
      %1350 = vmatprep.subr.mxu0 0.0
      %1351 = vmatpush1.msra.mxu0 0.0
      %1352 = vmatprep.subr.mxu0 0.0
      %1353 = vmatpush1.msra.mxu0 0.0
      %1354 = vmatprep.subr.mxu0 0.0
      %1355 = vmatpush1.msra.mxu0 0.0
      %1356 = vmatprep.subr.mxu0 0.0
      %1357 = vmatpush1.msra.mxu0 0.0
      %1358 = vmatprep.subr.mxu0 0.0
      %1359 = vmatpush1.msra.mxu0 0.0
      %1360 = vmatprep.subr.mxu0 0.0
      %1361 = vmatpush1.msra.mxu0 0.0
      %1362 = vmatprep.subr.mxu0 0.0
      %1363 = vmatpush1.msra.mxu0 0.0
      %1364 = vmatprep.subr.mxu0 0.0
      %1365 = vmatpush1.msra.mxu0 0.0
      %1366 = vmatprep.subr.mxu0 0.0
      %1367 = vmatpush1.msra.mxu0 0.0
      %1368 = vmatprep.subr.mxu0 0.0
      %1369 = vmatpush1.msra.mxu0 0.0
      %1370 = vmatprep.subr.mxu0 0.0
      %1371 = vmatpush1.msra.mxu0 0.0
      %1372 = vmatprep.subr.mxu0 0.0
      %1373 = vmatpush1.msra.mxu0 0.0
      %1374 = vmatprep.subr.mxu0 0.0
      %1375 = vmatpush1.msra.mxu0 0.0
      %1376 = vmatprep.subr.mxu0 0.0
      %1377 = vmatpush1.msra.mxu0 0.0
      %1378 = vmatprep.subr.mxu0 0.0
      %1379 = vmatpush1.msra.mxu0 0.0
      %1380 = vmatprep.subr.mxu0 0.0
      %1381 = vmatpush1.msra.mxu0 0.0
      %1382 = vmatprep.subr.mxu0 0.0
      %1383 = vmatpush1.msra.mxu0 0.0
      %1384 = vmatprep.subr.mxu0 0.0
      %1385 = vmatpush1.msra.mxu0 0.0
      %1386 = vmatprep.subr.mxu0 0.0
      %1387 = vmatpush1.msra.mxu0 0.0
      %1388 = vmatprep.subr.mxu0 0.0
      %1389 = vmatpush1.msra.mxu0 0.0
      %1390 = vmatprep.subr.mxu0 0.0
      %1391 = vmatpush1.msra.mxu0 0.0
      %1392 = vmatprep.subr.mxu0 0.0
      %1393 = vmatpush1.msra.mxu0 0.0
      %1394 = vmatprep.subr.mxu0 0.0
      %1395 = vmatpush1.msra.mxu0 0.0
      %1396 = vmatprep.mubr.f32.mxu0 0.0
      %1397 = vmatmul.mubr.f32.gmra.mrb[0].mxu0 %v1253
      %v1398 = vpop.f32.mrb[0].mxu0
      %v1399 = vadd.f32 0.0, %v1398
      %v1400 = vpop.f32.mrb[0].mxu0
      %1401 = vdwg.mxu0
      %v1402 = vadd.f32 %v1235, %v1328
      %v1403 = vadd.f32 %v1236, %v1330
      %v1404 = vadd.f32 %v1237, %v1399
      %s1405 = scalar_lea.vmem %s1, 56
      %v1406 = vld [vmem:[%s1405] sm:$0xff]
      %1407 = vrot.lane.b32.xlu0 %v247, 91
      %v1408 = vpop.permute.xlu0 %1407
      %1409 = vrot.lane.b32.xlu0 %v254, 91
      %v1410 = vpop.permute.xlu0 %1409
      %1411 = vrot.lane.b32.xlu0 %v248, 91
      %v1412 = vpop.permute.xlu0 %1411
      %1413 = vrot.lane.b32.xlu0 %v255, 91
      %v1414 = vpop.permute.xlu0 %1413
      %vm1415 = vcmask 744448
      %v1416 = vsel %vm1415, %v1408, %v1410
      %v1417 = vsel %vm1415, %v1410, %v1412
      %v1418 = vsel %vm1415, %v1412, %v1414
      %v1420 = vsel %vm268, %v1406, 0
      %v1422 = vsel %vm272, %v1416, 0
      %v1424 = vsel %vm272, %v1417, 0
      %v1426 = vsel %vm272, %v1418, 0
      %1428 = vmatprep.subr.mxu0 %v1424
      %1429 = vmatpush1.msra.mxu0 %v1422
      %1430 = vmatprep.subr.mxu0 0.0
      %1431 = vmatpush1.msra.mxu0 0.0
      %1432 = vmatprep.subr.mxu0 0.0
      %1433 = vmatpush1.msra.mxu0 0.0
      %1434 = vmatprep.subr.mxu0 0.0
      %1435 = vmatpush1.msra.mxu0 0.0
      %1436 = vmatprep.subr.mxu0 0.0
      %1437 = vmatpush1.msra.mxu0 0.0
      %1438 = vmatprep.subr.mxu0 0.0
      %1439 = vmatpush1.msra.mxu0 0.0
      %1440 = vmatprep.subr.mxu0 0.0
      %1441 = vmatpush1.msra.mxu0 0.0
      %1442 = vmatprep.subr.mxu0 0.0
      %1443 = vmatpush1.msra.mxu0 0.0
      %1444 = vmatprep.subr.mxu0 0.0
      %1445 = vmatpush1.msra.mxu0 0.0
      %1446 = vmatprep.subr.mxu0 0.0
      %1447 = vmatpush1.msra.mxu0 0.0
      %1448 = vmatprep.subr.mxu0 0.0
      %1449 = vmatpush1.msra.mxu0 0.0
      %1450 = vmatprep.subr.mxu0 0.0
      %1451 = vmatpush1.msra.mxu0 0.0
      %1452 = vmatprep.subr.mxu0 0.0
      %1453 = vmatpush1.msra.mxu0 0.0
      %1454 = vmatprep.subr.mxu0 0.0
      %1455 = vmatpush1.msra.mxu0 0.0
      %1456 = vmatprep.subr.mxu0 0.0
      %1457 = vmatpush1.msra.mxu0 0.0
      %1458 = vmatprep.subr.mxu0 0.0
      %1459 = vmatpush1.msra.mxu0 0.0
      %1460 = vmatprep.subr.mxu0 0.0
      %1461 = vmatpush1.msra.mxu0 0.0
      %1462 = vmatprep.subr.mxu0 0.0
      %1463 = vmatpush1.msra.mxu0 0.0
      %1464 = vmatprep.subr.mxu0 0.0
      %1465 = vmatpush1.msra.mxu0 0.0
      %1466 = vmatprep.subr.mxu0 0.0
      %1467 = vmatpush1.msra.mxu0 0.0
      %1468 = vmatprep.subr.mxu0 0.0
      %1469 = vmatpush1.msra.mxu0 0.0
      %1470 = vmatprep.subr.mxu0 0.0
      %1471 = vmatpush1.msra.mxu0 0.0
      %1472 = vmatprep.subr.mxu0 0.0
      %1473 = vmatpush1.msra.mxu0 0.0
      %1474 = vmatprep.subr.mxu0 0.0
      %1475 = vmatpush1.msra.mxu0 0.0
      %1476 = vmatprep.subr.mxu0 0.0
      %1477 = vmatpush1.msra.mxu0 0.0
      %1478 = vmatprep.subr.mxu0 0.0
      %1479 = vmatpush1.msra.mxu0 0.0
      %1480 = vmatprep.subr.mxu0 0.0
      %1481 = vmatpush1.msra.mxu0 0.0
      %1482 = vmatprep.subr.mxu0 0.0
      %1483 = vmatpush1.msra.mxu0 0.0
      %1484 = vmatprep.subr.mxu0 0.0
      %1485 = vmatpush1.msra.mxu0 0.0
      %1486 = vmatprep.subr.mxu0 0.0
      %1487 = vmatpush1.msra.mxu0 0.0
      %1488 = vmatprep.subr.mxu0 0.0
      %1489 = vmatpush1.msra.mxu0 0.0
      %1490 = vmatprep.subr.mxu0 0.0
      %1491 = vmatpush1.msra.mxu0 0.0
      %1492 = vmatprep.mubr.f32.mxu0 0.0
      %1493 = vmatmul.mubr.f32.gmra.mrb[0].mxu0 %v1420
      %v1494 = vpop.f32.mrb[0].mxu0
      %v1495 = vadd.f32 0.0, %v1494
      %v1496 = vpop.f32.mrb[0].mxu0
      %v1497 = vadd.f32 0.0, %v1496
      %1498 = vdwg.mxu0
      %1499 = vmatprep.subr.mxu0 0.0
      %1500 = vmatpush1.msra.mxu0 %v1426
      %1501 = vmatprep.subr.mxu0 0.0
      %1502 = vmatpush1.msra.mxu0 0.0
      %1503 = vmatprep.subr.mxu0 0.0
      %1504 = vmatpush1.msra.mxu0 0.0
      %1505 = vmatprep.subr.mxu0 0.0
      %1506 = vmatpush1.msra.mxu0 0.0
      %1507 = vmatprep.subr.mxu0 0.0
      %1508 = vmatpush1.msra.mxu0 0.0
      %1509 = vmatprep.subr.mxu0 0.0
      %1510 = vmatpush1.msra.mxu0 0.0
      %1511 = vmatprep.subr.mxu0 0.0
      %1512 = vmatpush1.msra.mxu0 0.0
      %1513 = vmatprep.subr.mxu0 0.0
      %1514 = vmatpush1.msra.mxu0 0.0
      %1515 = vmatprep.subr.mxu0 0.0
      %1516 = vmatpush1.msra.mxu0 0.0
      %1517 = vmatprep.subr.mxu0 0.0
      %1518 = vmatpush1.msra.mxu0 0.0
      %1519 = vmatprep.subr.mxu0 0.0
      %1520 = vmatpush1.msra.mxu0 0.0
      %1521 = vmatprep.subr.mxu0 0.0
      %1522 = vmatpush1.msra.mxu0 0.0
      %1523 = vmatprep.subr.mxu0 0.0
      %1524 = vmatpush1.msra.mxu0 0.0
      %1525 = vmatprep.subr.mxu0 0.0
      %1526 = vmatpush1.msra.mxu0 0.0
      %1527 = vmatprep.subr.mxu0 0.0
      %1528 = vmatpush1.msra.mxu0 0.0
      %1529 = vmatprep.subr.mxu0 0.0
      %1530 = vmatpush1.msra.mxu0 0.0
      %1531 = vmatprep.subr.mxu0 0.0
      %1532 = vmatpush1.msra.mxu0 0.0
      %1533 = vmatprep.subr.mxu0 0.0
      %1534 = vmatpush1.msra.mxu0 0.0
      %1535 = vmatprep.subr.mxu0 0.0
      %1536 = vmatpush1.msra.mxu0 0.0
      %1537 = vmatprep.subr.mxu0 0.0
      %1538 = vmatpush1.msra.mxu0 0.0
      %1539 = vmatprep.subr.mxu0 0.0
      %1540 = vmatpush1.msra.mxu0 0.0
      %1541 = vmatprep.subr.mxu0 0.0
      %1542 = vmatpush1.msra.mxu0 0.0
      %1543 = vmatprep.subr.mxu0 0.0
      %1544 = vmatpush1.msra.mxu0 0.0
      %1545 = vmatprep.subr.mxu0 0.0
      %1546 = vmatpush1.msra.mxu0 0.0
      %1547 = vmatprep.subr.mxu0 0.0
      %1548 = vmatpush1.msra.mxu0 0.0
      %1549 = vmatprep.subr.mxu0 0.0
      %1550 = vmatpush1.msra.mxu0 0.0
      %1551 = vmatprep.subr.mxu0 0.0
      %1552 = vmatpush1.msra.mxu0 0.0
      %1553 = vmatprep.subr.mxu0 0.0
      %1554 = vmatpush1.msra.mxu0 0.0
      %1555 = vmatprep.subr.mxu0 0.0
      %1556 = vmatpush1.msra.mxu0 0.0
      %1557 = vmatprep.subr.mxu0 0.0
      %1558 = vmatpush1.msra.mxu0 0.0
      %1559 = vmatprep.subr.mxu0 0.0
      %1560 = vmatpush1.msra.mxu0 0.0
      %1561 = vmatprep.subr.mxu0 0.0
      %1562 = vmatpush1.msra.mxu0 0.0
      %1563 = vmatprep.mubr.f32.mxu0 0.0
      %1564 = vmatmul.mubr.f32.gmra.mrb[0].mxu0 %v1420
      %v1565 = vpop.f32.mrb[0].mxu0
      %v1566 = vadd.f32 0.0, %v1565
      %v1567 = vpop.f32.mrb[0].mxu0
      %1568 = vdwg.mxu0
      %v1569 = vadd.f32 %v1402, %v1495
      %v1570 = vadd.f32 %v1403, %v1497
      %v1571 = vadd.f32 %v1404, %v1566
      %s1572 = scalar_lea.vmem %s1, 64
      %v1573 = vld [vmem:[%s1572] sm:$0xff]
      %1574 = vrot.lane.b32.xlu0 %v247, 90
      %v1575 = vpop.permute.xlu0 %1574
      %1576 = vrot.lane.b32.xlu0 %v254, 90
      %v1577 = vpop.permute.xlu0 %1576
      %1578 = vrot.lane.b32.xlu0 %v248, 90
      %v1579 = vpop.permute.xlu0 %1578
      %1580 = vrot.lane.b32.xlu0 %v255, 90
      %v1581 = vpop.permute.xlu0 %1580
      %vm1582 = vcmask 736256
      %v1583 = vsel %vm1582, %v1575, %v1577
      %v1584 = vsel %vm1582, %v1577, %v1579
      %v1585 = vsel %vm1582, %v1579, %v1581
      %v1587 = vsel %vm268, %v1573, 0
      %v1589 = vsel %vm272, %v1583, 0
      %v1591 = vsel %vm272, %v1584, 0
      %v1593 = vsel %vm272, %v1585, 0
      %1595 = vmatprep.subr.mxu0 %v1591
      %1596 = vmatpush1.msra.mxu0 %v1589
      %1597 = vmatprep.subr.mxu0 0.0
      %1598 = vmatpush1.msra.mxu0 0.0
      %1599 = vmatprep.subr.mxu0 0.0
      %1600 = vmatpush1.msra.mxu0 0.0
      %1601 = vmatprep.subr.mxu0 0.0
      %1602 = vmatpush1.msra.mxu0 0.0
      %1603 = vmatprep.subr.mxu0 0.0
      %1604 = vmatpush1.msra.mxu0 0.0
      %1605 = vmatprep.subr.mxu0 0.0
      %1606 = vmatpush1.msra.mxu0 0.0
      %1607 = vmatprep.subr.mxu0 0.0
      %1608 = vmatpush1.msra.mxu0 0.0
      %1609 = vmatprep.subr.mxu0 0.0
      %1610 = vmatpush1.msra.mxu0 0.0
      %1611 = vmatprep.subr.mxu0 0.0
      %1612 = vmatpush1.msra.mxu0 0.0
      %1613 = vmatprep.subr.mxu0 0.0
      %1614 = vmatpush1.msra.mxu0 0.0
      %1615 = vmatprep.subr.mxu0 0.0
      %1616 = vmatpush1.msra.mxu0 0.0
      %1617 = vmatprep.subr.mxu0 0.0
      %1618 = vmatpush1.msra.mxu0 0.0
      %1619 = vmatprep.subr.mxu0 0.0
      %1620 = vmatpush1.msra.mxu0 0.0
      %1621 = vmatprep.subr.mxu0 0.0
      %1622 = vmatpush1.msra.mxu0 0.0
      %1623 = vmatprep.subr.mxu0 0.0
      %1624 = vmatpush1.msra.mxu0 0.0
      %1625 = vmatprep.subr.mxu0 0.0
      %1626 = vmatpush1.msra.mxu0 0.0
      %1627 = vmatprep.subr.mxu0 0.0
      %1628 = vmatpush1.msra.mxu0 0.0
      %1629 = vmatprep.subr.mxu0 0.0
      %1630 = vmatpush1.msra.mxu0 0.0
      %1631 = vmatprep.subr.mxu0 0.0
      %1632 = vmatpush1.msra.mxu0 0.0
      %1633 = vmatprep.subr.mxu0 0.0
      %1634 = vmatpush1.msra.mxu0 0.0
      %1635 = vmatprep.subr.mxu0 0.0
      %1636 = vmatpush1.msra.mxu0 0.0
      %1637 = vmatprep.subr.mxu0 0.0
      %1638 = vmatpush1.msra.mxu0 0.0
      %1639 = vmatprep.subr.mxu0 0.0
      %1640 = vmatpush1.msra.mxu0 0.0
      %1641 = vmatprep.subr.mxu0 0.0
      %1642 = vmatpush1.msra.mxu0 0.0
      %1643 = vmatprep.subr.mxu0 0.0
      %1644 = vmatpush1.msra.mxu0 0.0
      %1645 = vmatprep.subr.mxu0 0.0
      %1646 = vmatpush1.msra.mxu0 0.0
      %1647 = vmatprep.subr.mxu0 0.0
      %1648 = vmatpush1.msra.mxu0 0.0
      %1649 = vmatprep.subr.mxu0 0.0
      %1650 = vmatpush1.msra.mxu0 0.0
      %1651 = vmatprep.subr.mxu0 0.0
      %1652 = vmatpush1.msra.mxu0 0.0
      %1653 = vmatprep.subr.mxu0 0.0
      %1654 = vmatpush1.msra.mxu0 0.0
      %1655 = vmatprep.subr.mxu0 0.0
      %1656 = vmatpush1.msra.mxu0 0.0
      %1657 = vmatprep.subr.mxu0 0.0
      %1658 = vmatpush1.msra.mxu0 0.0
      %1659 = vmatprep.mubr.f32.mxu0 0.0
      %1660 = vmatmul.mubr.f32.gmra.mrb[0].mxu0 %v1587
      %v1661 = vpop.f32.mrb[0].mxu0
      %v1662 = vadd.f32 0.0, %v1661
      %v1663 = vpop.f32.mrb[0].mxu0
      %v1664 = vadd.f32 0.0, %v1663
      %1665 = vdwg.mxu0
      %1666 = vmatprep.subr.mxu0 0.0
      %1667 = vmatpush1.msra.mxu0 %v1593
      %1668 = vmatprep.subr.mxu0 0.0
      %1669 = vmatpush1.msra.mxu0 0.0
      %1670 = vmatprep.subr.mxu0 0.0
      %1671 = vmatpush1.msra.mxu0 0.0
      %1672 = vmatprep.subr.mxu0 0.0
      %1673 = vmatpush1.msra.mxu0 0.0
      %1674 = vmatprep.subr.mxu0 0.0
      %1675 = vmatpush1.msra.mxu0 0.0
      %1676 = vmatprep.subr.mxu0 0.0
      %1677 = vmatpush1.msra.mxu0 0.0
      %1678 = vmatprep.subr.mxu0 0.0
      %1679 = vmatpush1.msra.mxu0 0.0
      %1680 = vmatprep.subr.mxu0 0.0
      %1681 = vmatpush1.msra.mxu0 0.0
      %1682 = vmatprep.subr.mxu0 0.0
      %1683 = vmatpush1.msra.mxu0 0.0
      %1684 = vmatprep.subr.mxu0 0.0
      %1685 = vmatpush1.msra.mxu0 0.0
      %1686 = vmatprep.subr.mxu0 0.0
      %1687 = vmatpush1.msra.mxu0 0.0
      %1688 = vmatprep.subr.mxu0 0.0
      %1689 = vmatpush1.msra.mxu0 0.0
      %1690 = vmatprep.subr.mxu0 0.0
      %1691 = vmatpush1.msra.mxu0 0.0
      %1692 = vmatprep.subr.mxu0 0.0
      %1693 = vmatpush1.msra.mxu0 0.0
      %1694 = vmatprep.subr.mxu0 0.0
      %1695 = vmatpush1.msra.mxu0 0.0
      %1696 = vmatprep.subr.mxu0 0.0
      %1697 = vmatpush1.msra.mxu0 0.0
      %1698 = vmatprep.subr.mxu0 0.0
      %1699 = vmatpush1.msra.mxu0 0.0
      %1700 = vmatprep.subr.mxu0 0.0
      %1701 = vmatpush1.msra.mxu0 0.0
      %1702 = vmatprep.subr.mxu0 0.0
      %1703 = vmatpush1.msra.mxu0 0.0
      %1704 = vmatprep.subr.mxu0 0.0
      %1705 = vmatpush1.msra.mxu0 0.0
      %1706 = vmatprep.subr.mxu0 0.0
      %1707 = vmatpush1.msra.mxu0 0.0
      %1708 = vmatprep.subr.mxu0 0.0
      %1709 = vmatpush1.msra.mxu0 0.0
      %1710 = vmatprep.subr.mxu0 0.0
      %1711 = vmatpush1.msra.mxu0 0.0
      %1712 = vmatprep.subr.mxu0 0.0
      %1713 = vmatpush1.msra.mxu0 0.0
      %1714 = vmatprep.subr.mxu0 0.0
      %1715 = vmatpush1.msra.mxu0 0.0
      %1716 = vmatprep.subr.mxu0 0.0
      %1717 = vmatpush1.msra.mxu0 0.0
      %1718 = vmatprep.subr.mxu0 0.0
      %1719 = vmatpush1.msra.mxu0 0.0
      %1720 = vmatprep.subr.mxu0 0.0
      %1721 = vmatpush1.msra.mxu0 0.0
      %1722 = vmatprep.subr.mxu0 0.0
      %1723 = vmatpush1.msra.mxu0 0.0
      %1724 = vmatprep.subr.mxu0 0.0
      %1725 = vmatpush1.msra.mxu0 0.0
      %1726 = vmatprep.subr.mxu0 0.0
      %1727 = vmatpush1.msra.mxu0 0.0
      %1728 = vmatprep.subr.mxu0 0.0
      %1729 = vmatpush1.msra.mxu0 0.0
      %1730 = vmatprep.mubr.f32.mxu0 0.0
      %1731 = vmatmul.mubr.f32.gmra.mrb[0].mxu0 %v1587
      %v1732 = vpop.f32.mrb[0].mxu0
      %v1733 = vadd.f32 0.0, %v1732
      %v1734 = vpop.f32.mrb[0].mxu0
      %1735 = vdwg.mxu0
      %v1736 = vadd.f32 %v1569, %v1662
      %v1737 = vadd.f32 %v1570, %v1664
      %v1738 = vadd.f32 %v1571, %v1733
      %v1739 = vld [vmem:[%s2] sm:$0xff]
      %1741 = vset.pattern.permute.xlu0 0
      %1742 = vperm.xlu0 %1741, %v1739
      %v1743 = vpop.permute.xlu0 %1742
      %v1745 = vadd.f32 %v1736, %v1743
      %v1746 = vadd.f32 %v1737, %v1743
      %v1747 = vadd.f32 %v1738, %v1743
      %v1748 = vld [vmem:[%s3] sm:$0x7]
      %v1750 = vlaneseq
      %v1751 = vshrl.u32 %v1750, 7
      %v1752 = vsub.s32 0, %v1751
      %v1753 = vrot.slane %v1748, %v1752
      %v1754 = vlaneseq
      %v1755 = vshrl.u32 %v1754, 7
      %v1756 = vsub.s32 1, %v1755
      %v1757 = vrot.slane %v1748, %v1756
      %v1758 = vlaneseq
      %v1759 = vshrl.u32 %v1758, 7
      %v1760 = vsub.s32 2, %v1759
      %v1761 = vrot.slane %v1748, %v1760
      %v1765 = vmul.f32 %v1745, %v1753
      %v1766 = vmul.f32 %v1746, %v1757
      %v1767 = vmul.f32 %v1747, %v1761
      %vm1768 = vcmask 1047556
      %v1769 = vsel %vm1768, %v1765, 0.0
      %v1770 = vsel %vm1768, %v1766, 0.0
      %v1771 = vadd.f32 %v1769, %v1770
      %v1772 = vsel %vm1768, %v1767, 0.0
      %v1773 = vadd.f32 %v1771, %v1772
      %1774 = vadd.xlane.f32.xlu0 %v1773
      %v1775 = vpop.xlane.xlu0 %1774
      %v1776 = vmul.f32 %v1775, 0.00390625
      %v1777 = vsub.f32 %v1745, %v1776
      %v1778 = vsub.f32 %v1746, %v1776
      %v1779 = vsub.f32 %v1747, %v1776
      %v1780 = vmul.f32 %v1777, %v1753
      %v1781 = vmul.f32 %v1778, %v1757
      %v1782 = vmul.f32 %v1779, %v1761
      %v1783 = vmul.f32 %v1780, %v1780
      %v1784 = vmul.f32 %v1781, %v1781
      %v1785 = vmul.f32 %v1782, %v1782
      %v1786 = vsel %vm1768, %v1783, 0.0
      %v1787 = vsel %vm1768, %v1784, 0.0
      %v1788 = vadd.f32 %v1786, %v1787
      %v1789 = vsel %vm1768, %v1785, 0.0
      %v1790 = vadd.f32 %v1788, %v1789
      %1791 = vadd.xlane.f32.xlu0 %v1790
      %v1792 = vpop.xlane.xlu0 %1791
      %v1793 = vmul.f32 %v1792, 0.00390625
      %v1794 = vadd.f32 %v1793, 1e-05
      %v1795 = vrsqrt.pop %v1794
      %v1796 = vmul.f32 %v1777, %v1795
      %v1797 = vmul.f32 %v1778, %v1795
      %v1798 = vmul.f32 %v1779, %v1795
      %v1799 = vmax.f32 %v1796, 0.0
      %v1800 = vmax.f32 %v1797, 0.0
      %v1801 = vmax.f32 %v1798, 0.0
      %1802 = vst [vmem:[%s246] sm:$0xf0] %v1799
      %1803 = vst [vmem:[%s246 + $0x8] sm:$0xf0] %v1800
      %1804 = vst [vmem:[%s246 + $0x10] sm:$0xf0] %v1801
      %1805 = vst [vmem:[%s246] sm:$0xf] %v1745
      %1806 = vst [vmem:[%s246 + $0x8] sm:$0xf] %v1746
      %1807 = vst [vmem:[%s246 + $0x10] sm:$0xf] %v1747
      %p1808 = scmp.eq.s32.totalorder %s18, 0
      // Predicated region
      $region37: #{conv2d_ibnorm_relu.2} parent=35 // pred_check
        %p1809 = pneg %p1808
      $region38: #{conv2d_ibnorm_relu.2} parent=35 // pred_check_branch
        %1811 = sbr.rel (%p1809) target = $region40
      $region39: #{conv2d_ibnorm_relu.2} parent=35 // pred_region
        %vm1812 = vcmask 3072
        %1813 = vst.msk [vmem:[%s5] sm:$0xf] %vm1812, 0.0
        %1814 = vst.msk [vmem:[%s6] sm:$0xf] %vm1812, 0.0
      $region40: #{conv2d_ibnorm_relu.2} parent=35 // pred_fallthru
        _
      %v1815 = vld [vmem:[%s5] sm:$0xf]
      %v1816 = vsel %vm272, %v1765, 0.0
      %v1817 = vsel %vm272, %v1766, 0.0
      %v1818 = vadd.f32 %v1816, %v1817
      %v1819 = vsel %vm272, %v1767, 0.0
      %v1820 = vadd.f32 %v1818, %v1819
      %1821 = vadd.xlane.f32.xlu0 %v1820
      %v1822 = vpop.xlane.xlu0 %1821
      %v1823 = vadd.f32 %v1815, %v1822
      %vm1824 = vcmask 3072
      %1825 = vst.msk [vmem:[%s5] sm:$0xf] %vm1824, %v1823
      %v1826 = vld [vmem:[%s6] sm:$0xf]
      %v1827 = vmul.f32 %v1765, %v1745
      %v1828 = vmul.f32 %v1766, %v1746
      %v1829 = vmul.f32 %v1767, %v1747
      %v1830 = vsel %vm272, %v1827, 0.0
      %v1831 = vsel %vm272, %v1828, 0.0
      %v1832 = vadd.f32 %v1830, %v1831
      %v1833 = vsel %vm272, %v1829, 0.0
      %v1834 = vadd.f32 %v1832, %v1833
      %1835 = vadd.xlane.f32.xlu0 %v1834
      %v1836 = vpop.xlane.xlu0 %1835
      %v1837 = vadd.f32 %v1826, %v1836
      %1838 = vst.msk [vmem:[%s6] sm:$0xf] %vm1824, %v1837
      %p1839 = scmp.lt.s32.totalorder %s18, 1
      %s1840 = scalar_select %p1839, %s18, 1
      %s1841 = smul.addr %s1840, 3
      %s1842 = smul.addr %s1841, 8
      %s1843 = scalar_lea.vmem %s4, %s1842
      // Predicated region
      $region41: #{conv2d_ibnorm_relu.2} parent=35 // pred_check
        %p1844 = pneg %p125
      $region42: #{conv2d_ibnorm_relu.2} parent=35 // pred_check_branch
        %1846 = sbr.rel (%p1844) target = $region44
      $region43: #{conv2d_ibnorm_relu.2} parent=35 // pred_region
        _
      $region44: #{conv2d_ibnorm_relu.2} parent=35 // pred_fallthru
        _
      // Predicated region
      $region45: #{conv2d_ibnorm_relu.2} parent=35 // pred_check
        %p1847 = pneg %p146
      $region46: #{conv2d_ibnorm_relu.2} parent=35 // pred_check_branch
        %1849 = sbr.rel (%p1847) target = $region48
      $region47: #{conv2d_ibnorm_relu.2} parent=35 // pred_region
        _
      $region48: #{conv2d_ibnorm_relu.2} parent=35 // pred_fallthru
        _
      // Predicated region
      $region49: #{conv2d_ibnorm_relu.2} parent=35 // pred_check
        %p1850 = pneg %p167
      $region50: #{conv2d_ibnorm_relu.2} parent=35 // pred_check_branch
        %1852 = sbr.rel (%p1850) target = $region52
      $region51: #{conv2d_ibnorm_relu.2} parent=35 // pred_region
        _
      $region52: #{conv2d_ibnorm_relu.2} parent=35 // pred_fallthru
        _
      // Predicated region
      $region53: #{conv2d_ibnorm_relu.2} parent=35 // pred_check
        %p1853 = pneg %p146
      $region54: #{conv2d_ibnorm_relu.2} parent=35 // pred_check_branch
        %1855 = sbr.rel (%p1853) target = $region56
      $region55: #{conv2d_ibnorm_relu.2} parent=35 // pred_region
        _
      $region56: #{conv2d_ibnorm_relu.2} parent=35 // pred_fallthru
        _
      // Predicated region
      $region57: #{conv2d_ibnorm_relu.2} parent=35 // pred_check
        %p1856 = pneg %p167
      $region58: #{conv2d_ibnorm_relu.2} parent=35 // pred_check_branch
        %1858 = sbr.rel (%p1856) target = $region60
      $region59: #{conv2d_ibnorm_relu.2} parent=35 // pred_region
        _
      $region60: #{conv2d_ibnorm_relu.2} parent=35 // pred_fallthru
        _
    $region36: #{conv2d_ibnorm_relu.2} parent=5 // pred_fallthru
      _
    %p1859 = scmp.le.s32.totalorder 2, %s13
    // Predicated region
    $region61: #{conv2d_ibnorm_relu.2} parent=5 // pred_check
      %p1860 = pneg %p1859
    $region62: #{conv2d_ibnorm_relu.2} parent=5 // pred_check_branch
      %1862 = sbr.rel (%p1860) target = $region64
    $region63: #{conv2d_ibnorm_relu.2} parent=5 // pred_region
      %s1863 = ssub.s32 %s13, 2
      // Predicated region
      $region65: #{conv2d_ibnorm_relu.2} parent=63 // pred_check
        %p1864 = pneg %p131
      $region66: #{conv2d_ibnorm_relu.2} parent=63 // pred_check_branch
        %1866 = sbr.rel (%p1864) target = $region68
      $region67: #{conv2d_ibnorm_relu.2} parent=63 // pred_region
        %p1867 = scmp.lt.s32.totalorder %s19, 1
        %s1868 = scalar_select %p1867, %s19, 1
        %s1869 = smul.addr %s1868, 3
        %s1870 = smul.addr %s1869, 8
        %s1871 = scalar_lea.vmem %s4, %s1870
      $region68: #{conv2d_ibnorm_relu.2} parent=63 // pred_fallthru
        _
    $region64: #{conv2d_ibnorm_relu.2} parent=5 // pred_fallthru
      _
  $region6: #{conv2d_ibnorm_relu.2} parent=0 // loop_footer
    %s17 = sadd.s32 1, %s13
  $region7: #{conv2d_ibnorm_relu.2} parent=0 // loop_footer_branch
    %12 = sbr.rel target = $region3
  $region8: #{conv2d_ibnorm_relu.2} parent=0 // loop_exit
    _

</llo_original>
